<compile_context>
chip_gen: v7x
topology: tpu7x:2x2x1
jax: 0.10.0
libtpu: 0.0.40
codegen_flags: <defaults>
</compile_context>

<pallas_src>
import functools

import jax
import jax.numpy as jnp
from jax.experimental import pallas as pl
from jax.experimental.pallas import tpu as pltpu

_LANE = 128
_SUBLANE = 8


def _round_up(x, m):
    return (x + m - 1) // m * m


def _elu(x):
    # ELU(alpha=1). Accurate expm1 substitute: polynomial near 0, exp(x)-1 elsewhere.
    small = jnp.abs(x) < 1e-3
    em1 = jnp.where(small, x + 0.5 * x * x, jnp.exp(x) - 1.0)
    return jnp.where(x > 0, x, em1)


def _pad2(a, rows, cols):
    out = jnp.zeros((rows, cols), jnp.float32)
    return out.at[: a.shape[0], : a.shape[1]].set(a.astype(jnp.float32))


# ------------------------------ fused kernel --------------------------------

def gin_fused_kernel(adj_ref, x_ref, mask_ref, *refs, num_layers):
    """Whole GIN forward in one kernel; intermediates stay resident in VMEM.

    adj_ref : [Np, Np]  dense A + (1+eps)I  (zero-padded)
    x_ref   : [Np, Fp]  node features       (zero-padded)
    mask_ref: [G,  Np]  one-hot graph membership (padded nodes belong to no graph)
    refs    : (w1,b1,w2,b2) * num_layers, wg_row, bg(SMEM), pw1_sum, pw1_max,
              pb1, pw2, pb2, out_ref
    """
    layer_refs = refs[: 4 * num_layers]
    (wg_ref, bg_ref, pw1s_ref, pw1m_ref, pb1_ref, pw2_ref, pb2_ref,
     out_ref) = refs[4 * num_layers:]

    adj = adj_ref[...]
    h = x_ref[...]

    # --- GINConv stack: h = MLP((A + (1+eps)I) @ h) ---
    for i in range(num_layers):
        w1 = layer_refs[4 * i][...]
        b1 = layer_refs[4 * i + 1][...]
        w2 = layer_refs[4 * i + 2][...]
        b2 = layer_refs[4 * i + 3][...]
        agg = jnp.dot(adj, h, preferred_element_type=jnp.float32)
        z = _elu(jnp.dot(agg, w1, preferred_element_type=jnp.float32) + b1)
        h = jnp.dot(z, w2, preferred_element_type=jnp.float32) + b2

    # --- ReadoutPhase ---
    mask = mask_ref[...]                                  # [G, Np]
    g_count, n_pad = mask.shape
    h_pad = h.shape[1]

    # gate = sigmoid(h @ wg + bg) computed as VPU multiply + lane reduction
    # (avoids a 1-lane MXU matmul / masked 1-lane store).
    gate_pre = jnp.sum(h * wg_ref[...], axis=-1, keepdims=True) + bg_ref[0, 0]
    gate = jax.nn.sigmoid(gate_pre)                       # [Np, 1]
    weighted = gate * h                                   # [Np, Hp]

    sum_pool = jnp.dot(mask, weighted, preferred_element_type=jnp.float32)  # [G, Hp]

    # Vectorized masked max over the node axis (additive -inf style mask).
    penalty = (mask - 1.0) * jnp.float32(1e30)            # 0 for members, -1e30 otherwise
    masked = (jnp.broadcast_to(h[None, :, :], (g_count, n_pad, h_pad))
              + jnp.broadcast_to(penalty[:, :, None], (g_count, n_pad, h_pad)))
    max_pool = jnp.max(masked, axis=1)                    # [G, Hp]

    # --- predict MLP; concat([sum_pool, max_pool]) folded into split weights ---
    hid = _elu(
        jnp.dot(sum_pool, pw1s_ref[...], preferred_element_type=jnp.float32)
        + jnp.dot(max_pool, pw1m_ref[...], preferred_element_type=jnp.float32)
        + pb1_ref[...]
    )
    out_ref[...] = (
        jnp.dot(hid, pw2_ref[...], preferred_element_type=jnp.float32) + pb2_ref[...]
    )


# ------------------------------- GIN wrapper --------------------------------

def init_linear(key, fan_in, fan_out):
    k1, k2 = jax.random.split(key)
    w = jax.random.normal(k1, (fan_in, fan_out), jnp.float32) * 0.1
    b = jax.random.normal(k2, (1, fan_out), jnp.float32) * 0.01
    return w, b


def init_gin_params(key, input_dim, hidden_dim, output_dim, num_layers):
    params = {"layers": []}
    for i in range(num_layers):
        key, k1, k2 = jax.random.split(key, 3)
        in_d = input_dim if i == 0 else hidden_dim
        w1, b1 = init_linear(k1, in_d, hidden_dim)
        w2, b2 = init_linear(k2, hidden_dim, hidden_dim)
        params["layers"].append((w1, b1, w2, b2))
    key, kg, kp1, kp2 = jax.random.split(key, 4)
    params["gate"] = init_linear(kg, hidden_dim, 1)
    params["pred1"] = init_linear(kp1, 2 * hidden_dim, 128)
    params["pred2"] = init_linear(kp2, 128, output_dim)
    return params


def gin_forward(params, x, edge_index, batch, num_graphs, eps=0.0):
    n, f_in = x.shape
    hidden = params["layers"][0][2].shape[1]
    pred_hidden = params["pred1"][0].shape[1]
    out_dim = params["pred2"][0].shape[1]
    num_layers = len(params["layers"])

    # lane-dense padded dims
    n_pad = _round_up(max(n, _SUBLANE), _LANE)
    f_pad = _round_up(f_in, _LANE)
    h_pad = _round_up(hidden, _LANE)
    ph_pad = _round_up(pred_hidden, _LANE)
    o_pad = _round_up(out_dim, _LANE)

    # dense adjacency: messages flow src -> dst; self-loops carry (1+eps)*x_i.
    src, dst = edge_index[0], edge_index[1]
    adj = jnp.zeros((n_pad, n_pad), jnp.float32).at[dst, src].add(1.0)
    adj = adj + (1.0 + eps) * jnp.eye(n_pad, dtype=jnp.float32)

    x_p = _pad2(x, n_pad, f_pad)

    # one-hot graph membership [G, Np]; padded nodes belong to no graph.
    mask = (batch[None, :] == jnp.arange(num_graphs, dtype=batch.dtype)[:, None])
    mask_p = _pad2(mask.astype(jnp.float32), num_graphs, n_pad)

    layer_inputs = []
    in_dim_pad = f_pad
    for (w1, b1, w2, b2) in params["layers"]:
        layer_inputs += [
            _pad2(w1, in_dim_pad, h_pad),
            _pad2(b1, 1, h_pad),
            _pad2(w2, h_pad, h_pad),
            _pad2(b2, 1, h_pad),
        ]
        in_dim_pad = h_pad

    wg, bg = params["gate"]
    wg_row = _pad2(wg.T, 1, h_pad)                 # gate weight as a lane-dense row
    bg_s = bg.reshape(1, 1).astype(jnp.float32)    # scalar bias -> SMEM

    pw1, pb1 = params["pred1"]
    pw1_sum = _pad2(pw1[:hidden], h_pad, ph_pad)   # rows acting on sum_pool
    pw1_max = _pad2(pw1[hidden:], h_pad, ph_pad)   # rows acting on max_pool
    pb1_p = _pad2(pb1, 1, ph_pad)

    pw2, pb2 = params["pred2"]
    pw2_p = _pad2(pw2, ph_pad, o_pad)
    pb2_p = _pad2(pb2, 1, o_pad)

    inputs = [adj, x_p, mask_p] + layer_inputs + [
        wg_row, bg_s, pw1_sum, pw1_max, pb1_p, pw2_p, pb2_p]

    vmem = pl.BlockSpec(memory_space=pltpu.MemorySpace.VMEM)
    smem = pl.BlockSpec(memory_space=pltpu.MemorySpace.SMEM)
    in_specs = ([vmem, vmem, vmem] + [vmem] * (4 * num_layers)
                + [vmem, smem, vmem, vmem, vmem, vmem, vmem])

    out = pl.pallas_call(
        functools.partial(gin_fused_kernel, num_layers=num_layers),
        out_shape=jax.ShapeDtypeStruct((num_graphs, o_pad), jnp.float32),
        in_specs=in_specs,
        out_specs=vmem,
    )(*inputs)
    return out[:, :out_dim]


# ---------------------------- pure-JAX reference -----------------------------

def gin_reference(params, x, edge_index, batch, num_graphs, eps=0.0):
    n = x.shape[0]
    src, dst = edge_index[0], edge_index[1]
    adj = jnp.zeros((n, n), jnp.float32).at[dst, src].add(1.0)
    adj = adj + (1.0 + eps) * jnp.eye(n, dtype=jnp.float32)
    h = x.astype(jnp.float32)
    for (w1, b1, w2, b2) in params["layers"]:
        agg = adj @ h
        h = _elu(agg @ w1 + b1) @ w2 + b2
    wg, bg = params["gate"]
    gate = jax.nn.sigmoid(h @ wg + bg)
    mask = (batch[None, :] == jnp.arange(num_graphs)[:, None]).astype(jnp.float32)
    sum_pool = mask @ (gate * h)
    masked = jnp.where(mask[:, :, None] > 0.5, h[None, :, :], jnp.float32(-1e30))
    max_pool = jnp.max(masked, axis=1)
    mol = jnp.concatenate([sum_pool, max_pool], axis=1)
    pw1, pb1 = params["pred1"]
    pw2, pb2 = params["pred2"]
    return _elu(mol @ pw1 + pb1) @ pw2 + pb2


# ----------------------------------- main ------------------------------------

if __name__ == "__main__":
    input_dim = 8
    hidden_dim = 32
    output_dim = 4
    num_layers = 2
    nodes_per_graph = 8
    num_graphs = 2
    n = nodes_per_graph * num_graphs

    key = jax.random.PRNGKey(0)
    key, kx, kp = jax.random.split(key, 3)

    # node features [N, input_dim]
    x = jax.random.normal(kx, (n, input_dim), jnp.float32)

    # ring graph within each component, undirected (both directions)
    src_list, dst_list = [], []
    for g in range(num_graphs):
        base = g * nodes_per_graph
        for i in range(nodes_per_graph):
            a = base + i
            b = base + (i + 1) % nodes_per_graph
            src_list += [a, b]
            dst_list += [b, a]
    edge_index = jnp.array([src_list, dst_list], dtype=jnp.int32)   # [2, E]

    batch = jnp.repeat(jnp.arange(num_graphs, dtype=jnp.int32), nodes_per_graph)  # [N]

    params = init_gin_params(kp, input_dim, hidden_dim, output_dim, num_layers)

    fwd = jax.jit(gin_forward, static_argnames=("num_graphs",))
    out = fwd(params, x, edge_index, batch, num_graphs=num_graphs)
    out = jax.block_until_ready(out)
    assert out.shape == (num_graphs, output_dim)

    ref = gin_reference(params, x, edge_index, batch, num_graphs)
    assert bool(jnp.allclose(out, ref, atol=1e-4, rtol=1e-4)), (out, ref)

    print("KERNEL_OK")
</pallas_src>

<mosaic_0001>
module attributes {stable_mosaic.version = 11 : i64} {
  func.func private @main(%arg0: i32) attributes {dimension_semantics = [#tpu.dimension_semantics<core_parallel>], iteration_bounds = array<i64: 2>, tpu.core_type = #tpu.core_type<sc_scalar_subcore>, window_params = []} {
    return
  }
}

module attributes {stable_mosaic.version = 11 : i64} {
  func.func private @main(%arg0: i32) attributes {dimension_semantics = [#tpu.dimension_semantics<core_parallel>], iteration_bounds = array<i64: 2>, tpu.core_type = #tpu.core_type<sc_scalar_subcore>, window_params = []} {
    return
  }
}

module attributes {stable_mosaic.version = 11 : i64} {
  func.func @gin_fused_kernel(%arg0: memref<128x128xf32, #tpu.memory_space<vmem>>, %arg1: memref<128x128xf32, #tpu.memory_space<vmem>>, %arg2: memref<2x128xf32, #tpu.memory_space<vmem>>, %arg3: memref<128x128xf32, #tpu.memory_space<vmem>>, %arg4: memref<1x128xf32, #tpu.memory_space<vmem>>, %arg5: memref<128x128xf32, #tpu.memory_space<vmem>>, %arg6: memref<1x128xf32, #tpu.memory_space<vmem>>, %arg7: memref<128x128xf32, #tpu.memory_space<vmem>>, %arg8: memref<1x128xf32, #tpu.memory_space<vmem>>, %arg9: memref<128x128xf32, #tpu.memory_space<vmem>>, %arg10: memref<1x128xf32, #tpu.memory_space<vmem>>, %arg11: memref<1x128xf32, #tpu.memory_space<vmem>>, %arg12: memref<1x1xf32, #tpu.memory_space<smem>>, %arg13: memref<128x128xf32, #tpu.memory_space<vmem>>, %arg14: memref<128x128xf32, #tpu.memory_space<vmem>>, %arg15: memref<1x128xf32, #tpu.memory_space<vmem>>, %arg16: memref<128x128xf32, #tpu.memory_space<vmem>>, %arg17: memref<1x128xf32, #tpu.memory_space<vmem>>, %arg18: memref<2x128xf32, #tpu.memory_space<vmem>>) attributes {dimension_semantics = [], scalar_prefetch = 0 : i64, scratch_operands = 0 : i64, tpu.core_type = #tpu.core_type<tc>} {
    %c0 = arith.constant 0 : index
    %c0_0 = arith.constant 0 : index
    %0 = vector.load %arg0[%c0, %c0_0] : memref<128x128xf32, #tpu.memory_space<vmem>>, vector<128x128xf32>
    %c0_1 = arith.constant 0 : index
    %c0_2 = arith.constant 0 : index
    %1 = vector.load %arg1[%c0_1, %c0_2] : memref<128x128xf32, #tpu.memory_space<vmem>>, vector<128x128xf32>
    %c0_3 = arith.constant 0 : index
    %c0_4 = arith.constant 0 : index
    %2 = vector.load %arg3[%c0_3, %c0_4] : memref<128x128xf32, #tpu.memory_space<vmem>>, vector<128x128xf32>
    %c0_5 = arith.constant 0 : index
    %c0_6 = arith.constant 0 : index
    %3 = vector.load %arg4[%c0_5, %c0_6] : memref<1x128xf32, #tpu.memory_space<vmem>>, vector<1x128xf32>
    %c0_7 = arith.constant 0 : index
    %c0_8 = arith.constant 0 : index
    %4 = vector.load %arg5[%c0_7, %c0_8] : memref<128x128xf32, #tpu.memory_space<vmem>>, vector<128x128xf32>
    %c0_9 = arith.constant 0 : index
    %c0_10 = arith.constant 0 : index
    %5 = vector.load %arg6[%c0_9, %c0_10] : memref<1x128xf32, #tpu.memory_space<vmem>>, vector<1x128xf32>
    %cst = arith.constant dense<0.000000e+00> : vector<128x128xf32>
    %6 = tpu.matmul %0, %1, %cst {dimension_numbers = #tpu.dot_dimension_numbers<[1], [0], [0], [1], [0, 0, 1, 1], [], []>} : vector<128x128xf32>, vector<128x128xf32>, vector<128x128xf32> -> vector<128x128xf32>
    %cst_11 = arith.constant dense<0.000000e+00> : vector<128x128xf32>
    %7 = tpu.matmul %6, %2, %cst_11 {dimension_numbers = #tpu.dot_dimension_numbers<[1], [0], [0], [1], [0, 0, 1, 1], [], []>} : vector<128x128xf32>, vector<128x128xf32>, vector<128x128xf32> -> vector<128x128xf32>
    %8 = vector.broadcast %3 : vector<1x128xf32> to vector<128x128xf32>
    %9 = arith.addf %7, %8 : vector<128x128xf32>
    %10 = math.absf %9 : vector<128x128xf32>
    %cst_12 = arith.constant 1.000000e-03 : f32
    %11 = vector.broadcast %cst_12 : f32 to vector<128x128xf32>
    %12 = arith.cmpf olt, %10, %11 : vector<128x128xf32>
    %cst_13 = arith.constant 5.000000e-01 : f32
    %13 = vector.broadcast %cst_13 : f32 to vector<128x128xf32>
    %14 = arith.mulf %13, %9 : vector<128x128xf32>
    %15 = arith.mulf %14, %9 : vector<128x128xf32>
    %16 = arith.addf %9, %15 : vector<128x128xf32>
    %17 = math.exp %9 : vector<128x128xf32>
    %cst_14 = arith.constant 1.000000e+00 : f32
    %18 = vector.broadcast %cst_14 : f32 to vector<128x128xf32>
    %19 = arith.subf %17, %18 : vector<128x128xf32>
    %20 = arith.select %12, %16, %19 : vector<128x128xi1>, vector<128x128xf32>
    %cst_15 = arith.constant 0.000000e+00 : f32
    %21 = vector.broadcast %cst_15 : f32 to vector<128x128xf32>
    %22 = arith.cmpf ogt, %9, %21 : vector<128x128xf32>
    %23 = arith.select %22, %9, %20 : vector<128x128xi1>, vector<128x128xf32>
    %cst_16 = arith.constant dense<0.000000e+00> : vector<128x128xf32>
    %24 = tpu.matmul %23, %4, %cst_16 {dimension_numbers = #tpu.dot_dimension_numbers<[1], [0], [0], [1], [0, 0, 1, 1], [], []>} : vector<128x128xf32>, vector<128x128xf32>, vector<128x128xf32> -> vector<128x128xf32>
    %25 = vector.broadcast %5 : vector<1x128xf32> to vector<128x128xf32>
    %26 = arith.addf %24, %25 : vector<128x128xf32>
    %c0_17 = arith.constant 0 : index
    %c0_18 = arith.constant 0 : index
    %27 = vector.load %arg7[%c0_17, %c0_18] : memref<128x128xf32, #tpu.memory_space<vmem>>, vector<128x128xf32>
    %c0_19 = arith.constant 0 : index
    %c0_20 = arith.constant 0 : index
    %28 = vector.load %arg8[%c0_19, %c0_20] : memref<1x128xf32, #tpu.memory_space<vmem>>, vector<1x128xf32>
    %c0_21 = arith.constant 0 : index
    %c0_22 = arith.constant 0 : index
    %29 = vector.load %arg9[%c0_21, %c0_22] : memref<128x128xf32, #tpu.memory_space<vmem>>, vector<128x128xf32>
    %c0_23 = arith.constant 0 : index
    %c0_24 = arith.constant 0 : index
    %30 = vector.load %arg10[%c0_23, %c0_24] : memref<1x128xf32, #tpu.memory_space<vmem>>, vector<1x128xf32>
    %cst_25 = arith.constant dense<0.000000e+00> : vector<128x128xf32>
    %31 = tpu.matmul %0, %26, %cst_25 {dimension_numbers = #tpu.dot_dimension_numbers<[1], [0], [0], [1], [0, 0, 1, 1], [], []>} : vector<128x128xf32>, vector<128x128xf32>, vector<128x128xf32> -> vector<128x128xf32>
    %cst_26 = arith.constant dense<0.000000e+00> : vector<128x128xf32>
    %32 = tpu.matmul %31, %27, %cst_26 {dimension_numbers = #tpu.dot_dimension_numbers<[1], [0], [0], [1], [0, 0, 1, 1], [], []>} : vector<128x128xf32>, vector<128x128xf32>, vector<128x128xf32> -> vector<128x128xf32>
    %33 = vector.broadcast %28 : vector<1x128xf32> to vector<128x128xf32>
    %34 = arith.addf %32, %33 : vector<128x128xf32>
    %35 = math.absf %34 : vector<128x128xf32>
    %cst_27 = arith.constant 1.000000e-03 : f32
    %36 = vector.broadcast %cst_27 : f32 to vector<128x128xf32>
    %37 = arith.cmpf olt, %35, %36 : vector<128x128xf32>
    %cst_28 = arith.constant 5.000000e-01 : f32
    %38 = vector.broadcast %cst_28 : f32 to vector<128x128xf32>
    %39 = arith.mulf %38, %34 : vector<128x128xf32>
    %40 = arith.mulf %39, %34 : vector<128x128xf32>
    %41 = arith.addf %34, %40 : vector<128x128xf32>
    %42 = math.exp %34 : vector<128x128xf32>
    %cst_29 = arith.constant 1.000000e+00 : f32
    %43 = vector.broadcast %cst_29 : f32 to vector<128x128xf32>
    %44 = arith.subf %42, %43 : vector<128x128xf32>
    %45 = arith.select %37, %41, %44 : vector<128x128xi1>, vector<128x128xf32>
    %cst_30 = arith.constant 0.000000e+00 : f32
    %46 = vector.broadcast %cst_30 : f32 to vector<128x128xf32>
    %47 = arith.cmpf ogt, %34, %46 : vector<128x128xf32>
    %48 = arith.select %47, %34, %45 : vector<128x128xi1>, vector<128x128xf32>
    %cst_31 = arith.constant dense<0.000000e+00> : vector<128x128xf32>
    %49 = tpu.matmul %48, %29, %cst_31 {dimension_numbers = #tpu.dot_dimension_numbers<[1], [0], [0], [1], [0, 0, 1, 1], [], []>} : vector<128x128xf32>, vector<128x128xf32>, vector<128x128xf32> -> vector<128x128xf32>
    %50 = vector.broadcast %30 : vector<1x128xf32> to vector<128x128xf32>
    %51 = arith.addf %49, %50 : vector<128x128xf32>
    %c0_32 = arith.constant 0 : index
    %c0_33 = arith.constant 0 : index
    %52 = vector.load %arg2[%c0_32, %c0_33] : memref<2x128xf32, #tpu.memory_space<vmem>>, vector<2x128xf32>
    %c0_34 = arith.constant 0 : index
    %c0_35 = arith.constant 0 : index
    %53 = vector.load %arg11[%c0_34, %c0_35] : memref<1x128xf32, #tpu.memory_space<vmem>>, vector<1x128xf32>
    %54 = vector.broadcast %53 : vector<1x128xf32> to vector<128x128xf32>
    %55 = arith.mulf %51, %54 : vector<128x128xf32>
    %cst_36 = arith.constant dense<0.000000e+00> : vector<128xf32>
    %56 = vector.multi_reduction <add>, %55, %cst_36 [1] : vector<128x128xf32> to vector<128xf32>
    %57 = vector.shape_cast %56 : vector<128xf32> to vector<128x1xf32>
    %c0_37 = arith.constant 0 : index
    %c0_38 = arith.constant 0 : index
    %58 = memref.load %arg12[%c0_37, %c0_38] : memref<1x1xf32, #tpu.memory_space<smem>>
    %59 = vector.broadcast %58 : f32 to vector<128x1xf32>
    %60 = arith.addf %57, %59 : vector<128x1xf32>
    %61 = arith.negf %60 : vector<128x1xf32>
    %62 = math.exp %61 : vector<128x1xf32>
    %cst_39 = arith.constant 1.000000e+00 : f32
    %63 = vector.broadcast %cst_39 : f32 to vector<128x1xf32>
    %64 = arith.addf %63, %62 : vector<128x1xf32>
    %65 = arith.divf %63, %64 : vector<128x1xf32>
    %66 = vector.broadcast %65 : vector<128x1xf32> to vector<128x128xf32>
    %67 = arith.mulf %66, %51 : vector<128x128xf32>
    %cst_40 = arith.constant dense<0.000000e+00> : vector<2x128xf32>
    %68 = tpu.matmul %52, %67, %cst_40 {dimension_numbers = #tpu.dot_dimension_numbers<[1], [0], [0], [1], [0, 0, 1, 1], [], []>} : vector<2x128xf32>, vector<128x128xf32>, vector<2x128xf32> -> vector<2x128xf32>
    %cst_41 = arith.constant 1.000000e+00 : f32
    %69 = vector.broadcast %cst_41 : f32 to vector<2x128xf32>
    %70 = arith.subf %52, %69 : vector<2x128xf32>
    %cst_42 = arith.constant 1.000000e+30 : f32
    %71 = vector.broadcast %cst_42 : f32 to vector<2x128xf32>
    %72 = arith.mulf %70, %71 : vector<2x128xf32>
    %73 = vector.shape_cast %51 : vector<128x128xf32> to vector<1x128x128xf32>
    %74 = vector.shape_cast %73 : vector<1x128x128xf32> to vector<1x128x128xf32>
    %75 = vector.broadcast %74 : vector<1x128x128xf32> to vector<2x128x128xf32>
    %76 = vector.shape_cast %72 : vector<2x128xf32> to vector<2x128x1xf32>
    %77 = vector.shape_cast %76 : vector<2x128x1xf32> to vector<2x128x1xf32>
    %78 = vector.broadcast %77 : vector<2x128x1xf32> to vector<2x128x128xf32>
    %79 = arith.addf %75, %78 : vector<2x128x128xf32>
    %cst_43 = arith.constant dense<0xFF800000> : vector<2x128xf32>
    %80 = vector.multi_reduction <maximumf>, %79, %cst_43 [1] : vector<2x128x128xf32> to vector<2x128xf32>
    %c0_44 = arith.constant 0 : index
    %c0_45 = arith.constant 0 : index
    %81 = vector.load %arg13[%c0_44, %c0_45] : memref<128x128xf32, #tpu.memory_space<vmem>>, vector<128x128xf32>
    %cst_46 = arith.constant dense<0.000000e+00> : vector<2x128xf32>
    %82 = tpu.matmul %68, %81, %cst_46 {dimension_numbers = #tpu.dot_dimension_numbers<[1], [0], [0], [1], [0, 0, 1, 1], [], []>} : vector<2x128xf32>, vector<128x128xf32>, vector<2x128xf32> -> vector<2x128xf32>
    %c0_47 = arith.constant 0 : index
    %c0_48 = arith.constant 0 : index
    %83 = vector.load %arg14[%c0_47, %c0_48] : memref<128x128xf32, #tpu.memory_space<vmem>>, vector<128x128xf32>
    %cst_49 = arith.constant dense<0.000000e+00> : vector<2x128xf32>
    %84 = tpu.matmul %80, %83, %cst_49 {dimension_numbers = #tpu.dot_dimension_numbers<[1], [0], [0], [1], [0, 0, 1, 1], [], []>} : vector<2x128xf32>, vector<128x128xf32>, vector<2x128xf32> -> vector<2x128xf32>
    %85 = arith.addf %82, %84 : vector<2x128xf32>
    %c0_50 = arith.constant 0 : index
    %c0_51 = arith.constant 0 : index
    %86 = vector.load %arg15[%c0_50, %c0_51] : memref<1x128xf32, #tpu.memory_space<vmem>>, vector<1x128xf32>
    %87 = vector.broadcast %86 : vector<1x128xf32> to vector<2x128xf32>
    %88 = arith.addf %85, %87 : vector<2x128xf32>
    %89 = math.absf %88 : vector<2x128xf32>
    %cst_52 = arith.constant 1.000000e-03 : f32
    %90 = vector.broadcast %cst_52 : f32 to vector<2x128xf32>
    %91 = arith.cmpf olt, %89, %90 : vector<2x128xf32>
    %cst_53 = arith.constant 5.000000e-01 : f32
    %92 = vector.broadcast %cst_53 : f32 to vector<2x128xf32>
    %93 = arith.mulf %92, %88 : vector<2x128xf32>
    %94 = arith.mulf %93, %88 : vector<2x128xf32>
    %95 = arith.addf %88, %94 : vector<2x128xf32>
    %96 = math.exp %88 : vector<2x128xf32>
    %cst_54 = arith.constant 1.000000e+00 : f32
    %97 = vector.broadcast %cst_54 : f32 to vector<2x128xf32>
    %98 = arith.subf %96, %97 : vector<2x128xf32>
    %99 = arith.select %91, %95, %98 : vector<2x128xi1>, vector<2x128xf32>
    %cst_55 = arith.constant 0.000000e+00 : f32
    %100 = vector.broadcast %cst_55 : f32 to vector<2x128xf32>
    %101 = arith.cmpf ogt, %88, %100 : vector<2x128xf32>
    %102 = arith.select %101, %88, %99 : vector<2x128xi1>, vector<2x128xf32>
    %c0_56 = arith.constant 0 : index
    %c0_57 = arith.constant 0 : index
    %103 = vector.load %arg16[%c0_56, %c0_57] : memref<128x128xf32, #tpu.memory_space<vmem>>, vector<128x128xf32>
    %cst_58 = arith.constant dense<0.000000e+00> : vector<2x128xf32>
    %104 = tpu.matmul %102, %103, %cst_58 {dimension_numbers = #tpu.dot_dimension_numbers<[1], [0], [0], [1], [0, 0, 1, 1], [], []>} : vector<2x128xf32>, vector<128x128xf32>, vector<2x128xf32> -> vector<2x128xf32>
    %c0_59 = arith.constant 0 : index
    %c0_60 = arith.constant 0 : index
    %105 = vector.load %arg17[%c0_59, %c0_60] : memref<1x128xf32, #tpu.memory_space<vmem>>, vector<1x128xf32>
    %106 = vector.broadcast %105 : vector<1x128xf32> to vector<2x128xf32>
    %107 = arith.addf %104, %106 : vector<2x128xf32>
    %c0_61 = arith.constant 0 : index
    %c0_62 = arith.constant 0 : index
    %108 = vector.load %arg18[%c0_61, %c0_62] : memref<2x128xf32, #tpu.memory_space<vmem>>, vector<2x128xf32>
    tpu.vector_store %arg18[%c0_61, %c0_62], %107 {strides = array<i32>} : memref<2x128xf32, #tpu.memory_space<vmem>>, vector<2x128xf32>,
    return
  }
}

</mosaic_0001>

<llo_original>
// kernel: gin_forward.1
$region0: #{gin_forward.1}
  #allocation0 [shape = 'u32[]', space=smem, size = 0x4, offset = 0x4, fixed_abs, tag = 'smem constant byte address 0x4 - core index']
  #allocation1 [shape = 'u32[144,128]{1,0:T(1,128)}', space=vmem, size = 0x12000, scoped, tag = 'internal scratch']
  #allocation2 [shape = 'f32[1,1]{1,0:T(1,128)S(6)}', space=smem, size = 0x200, scoped, tag = 'scoped memory for gin_forward.1']
  %s0 = inlined_call_operand.hbm [shape: f32[128,128], index: 0, kind: input, shape index: {}]
  %s1 = inlined_call_operand.vmem [shape: f32[128,128], index: 1, kind: input, shape index: {}]
  %s2 = inlined_call_operand.vmem [shape: f32[2,128], index: 2, kind: input, shape index: {}]
  %s3 = inlined_call_operand.vmem [shape: f32[128,128], index: 3, kind: input, shape index: {}]
  %s4 = inlined_call_operand.vmem [shape: f32[1,128], index: 4, kind: input, shape index: {}]
  %s5 = inlined_call_operand.vmem [shape: f32[128,128], index: 5, kind: input, shape index: {}]
  %s6 = inlined_call_operand.vmem [shape: f32[1,128], index: 6, kind: input, shape index: {}]
  %s7 = inlined_call_operand.vmem [shape: f32[128,128], index: 7, kind: input, shape index: {}]
  %s8 = inlined_call_operand.vmem [shape: f32[1,128], index: 8, kind: input, shape index: {}]
  %s9 = inlined_call_operand.vmem [shape: f32[128,128], index: 9, kind: input, shape index: {}]
  %s10 = inlined_call_operand.vmem [shape: f32[1,128], index: 10, kind: input, shape index: {}]
  %s11 = inlined_call_operand.vmem [shape: f32[1,128], index: 11, kind: input, shape index: {}]
  %s12 = inlined_call_operand.<no memory space> [shape: f32[1,1], index: 12, kind: input, shape index: {}]
  %s13 = inlined_call_operand.vmem [shape: f32[128,128], index: 13, kind: input, shape index: {}]
  %s14 = inlined_call_operand.vmem [shape: f32[128,128], index: 14, kind: input, shape index: {}]
  %s15 = inlined_call_operand.vmem [shape: f32[1,128], index: 15, kind: input, shape index: {}]
  %s16 = inlined_call_operand.vmem [shape: f32[128,128], index: 16, kind: input, shape index: {}]
  %s17 = inlined_call_operand.vmem [shape: f32[1,128], index: 17, kind: input, shape index: {}]
  %s18 = inlined_call_operand.hbm [shape: f32[2,128], index: 18, kind: output, shape index: {}]
  %s19 = sld [smem:[#allocation0]]
  $region86: #{gin_forward.1} parent=0
    _
  %s21 = ssub.s32 1, %s19
  %s22 = scalar_select 0, %s21, %s19
  %23 = sst [smem:[#allocation2]] %s12
  $region1: #{gin_forward.1} parent=0
    #allocation3 [shape = 'u8[65536]{0}', space=vmem, size = 0x10000, scoped, tag = 'input window, operand 0, single buffered']
    #allocation4 [shape = 's32[1]{0}', space=sflag, size = 0x4, scoped, tag = 'scoped memory for gin_forward.1']
    #allocation5 [shape = 's32[1]{0}', space=sflag, size = 0x4, scoped, tag = 'scoped memory for gin_forward.1']
    #allocation6 [shape = 'u8[1024]{0}', space=vmem, size = 0x400, scoped, tag = 'output window, operand 0, single buffered']
    %24 = vsyncpa [#allocation4], 0
    %25 = vsyncpa [#allocation5], 0
    // Predicated region
    $region2: #{gin_forward.1} parent=1 // pred_check
      _
    $region3: #{gin_forward.1} parent=1 // pred_check_branch
      %27 = sbr.rel (0) target = $region5
    $region4: #{gin_forward.1} parent=1 // pred_region
      %s29 = ssub.s32 2048, 2048
      %30 = vsyncadd [#allocation4], %s29
      %s31 = sshll.u32 [#allocation3], 4
      %s32 = int_to_ptr.vmem [resolvable:$true] %s31
      %37 = dma.hbm_to_vmem [thread:$0]  %s0, 2048, %s32, [#allocation4], 128, 128, 8
    $region5: #{gin_forward.1} parent=1 // pred_fallthru
      _
    // Predicated region
    $region6: #{gin_forward.1} parent=1 // pred_check
      _
    $region7: #{gin_forward.1} parent=1 // pred_check_branch
      %39 = sbr.rel (0) target = $region9
    $region8: #{gin_forward.1} parent=1 // pred_region
      _
    $region9: #{gin_forward.1} parent=1 // pred_fallthru
      _
    // Predicated region
    $region10: #{gin_forward.1} parent=1 // pred_check
      _
    $region11: #{gin_forward.1} parent=1 // pred_check_branch
      %41 = sbr.rel (0) target = $region13
    $region12: #{gin_forward.1} parent=1 // pred_region
      _
    $region13: #{gin_forward.1} parent=1 // pred_fallthru
      _
    // Predicated region
    $region14: #{gin_forward.1} parent=1 // pred_check
      _
    $region15: #{gin_forward.1} parent=1 // pred_check_branch
      %43 = sbr.rel (0) target = $region17
    $region16: #{gin_forward.1} parent=1 // pred_region
      _
    $region17: #{gin_forward.1} parent=1 // pred_fallthru
      _
    // Predicated region
    $region18: #{gin_forward.1} parent=1 // pred_check
      _
    $region19: #{gin_forward.1} parent=1 // pred_check_branch
      %45 = sbr.rel (0) target = $region21
    $region20: #{gin_forward.1} parent=1 // pred_region
      _
    $region21: #{gin_forward.1} parent=1 // pred_fallthru
      _
    // Predicated region
    $region22: #{gin_forward.1} parent=1 // pred_check
      _
    $region23: #{gin_forward.1} parent=1 // pred_check_branch
      %47 = sbr.rel (0) target = $region25
    $region24: #{gin_forward.1} parent=1 // pred_region
      _
    $region25: #{gin_forward.1} parent=1 // pred_fallthru
      _
    // Predicated region
    $region26: #{gin_forward.1} parent=1 // pred_check
      _
    $region27: #{gin_forward.1} parent=1 // pred_check_branch
      %49 = sbr.rel (0) target = $region29
    $region28: #{gin_forward.1} parent=1 // pred_region
      _
    $region29: #{gin_forward.1} parent=1 // pred_fallthru
      _
    // Predicated region
    $region30: #{gin_forward.1} parent=1 // pred_check
      _
    $region31: #{gin_forward.1} parent=1 // pred_check_branch
      %51 = sbr.rel (0) target = $region33
    $region32: #{gin_forward.1} parent=1 // pred_region
      _
    $region33: #{gin_forward.1} parent=1 // pred_fallthru
      _
    // Predicated region
    $region34: #{gin_forward.1} parent=1 // pred_check
      _
    $region35: #{gin_forward.1} parent=1 // pred_check_branch
      %53 = sbr.rel (0) target = $region37
    $region36: #{gin_forward.1} parent=1 // pred_region
      _
    $region37: #{gin_forward.1} parent=1 // pred_fallthru
      _
    // Predicated region
    $region38: #{gin_forward.1} parent=1 // pred_check
      _
    $region39: #{gin_forward.1} parent=1 // pred_check_branch
      %55 = sbr.rel (0) target = $region41
    $region40: #{gin_forward.1} parent=1 // pred_region
      _
    $region41: #{gin_forward.1} parent=1 // pred_fallthru
      _
    // Predicated region
    $region42: #{gin_forward.1} parent=1 // pred_check
      _
    $region43: #{gin_forward.1} parent=1 // pred_check_branch
      %57 = sbr.rel (0) target = $region45
    $region44: #{gin_forward.1} parent=1 // pred_region
      _
    $region45: #{gin_forward.1} parent=1 // pred_fallthru
      _
    // Predicated region
    $region46: #{gin_forward.1} parent=1 // pred_check
      _
    $region47: #{gin_forward.1} parent=1 // pred_check_branch
      %59 = sbr.rel (0) target = $region49
    $region48: #{gin_forward.1} parent=1 // pred_region
      _
    $region49: #{gin_forward.1} parent=1 // pred_fallthru
      _
    // Predicated region
    $region50: #{gin_forward.1} parent=1 // pred_check
      _
    $region51: #{gin_forward.1} parent=1 // pred_check_branch
      %61 = sbr.rel (0) target = $region53
    $region52: #{gin_forward.1} parent=1 // pred_region
      _
    $region53: #{gin_forward.1} parent=1 // pred_fallthru
      _
    // Predicated region
    $region54: #{gin_forward.1} parent=1 // pred_check
      _
    $region55: #{gin_forward.1} parent=1 // pred_check_branch
      %63 = sbr.rel (0) target = $region57
    $region56: #{gin_forward.1} parent=1 // pred_region
      _
    $region57: #{gin_forward.1} parent=1 // pred_fallthru
      _
    // Predicated region
    $region58: #{gin_forward.1} parent=1 // pred_check
      _
    $region59: #{gin_forward.1} parent=1 // pred_check_branch
      %65 = sbr.rel (0) target = $region61
    $region60: #{gin_forward.1} parent=1 // pred_region
      _
    $region61: #{gin_forward.1} parent=1 // pred_fallthru
      _
    // Predicated region
    $region62: #{gin_forward.1} parent=1 // pred_check
      _
    $region63: #{gin_forward.1} parent=1 // pred_check_branch
      %67 = sbr.rel (0) target = $region65
    $region64: #{gin_forward.1} parent=1 // pred_region
      _
    $region65: #{gin_forward.1} parent=1 // pred_fallthru
      _
    // Predicated region
    $region66: #{gin_forward.1} parent=1 // pred_check
      _
    $region67: #{gin_forward.1} parent=1 // pred_check_branch
      %69 = sbr.rel (0) target = $region69
    $region68: #{gin_forward.1} parent=1 // pred_region
      _
    $region69: #{gin_forward.1} parent=1 // pred_fallthru
      _
    // Predicated region
    $region70: #{gin_forward.1} parent=1 // pred_check
      _
    $region71: #{gin_forward.1} parent=1 // pred_check_branch
      %71 = sbr.rel (0) target = $region73
    $region72: #{gin_forward.1} parent=1 // pred_region
      _
    $region73: #{gin_forward.1} parent=1 // pred_fallthru
      _
    // Predicated region
    $region74: #{gin_forward.1} parent=1 // pred_check
      _
    $region75: #{gin_forward.1} parent=1 // pred_check_branch
      %73 = sbr.rel (0) target = $region77
    $region76: #{gin_forward.1} parent=1 // pred_region
      %74 = dma.done [#allocation4], 2048
    $region77: #{gin_forward.1} parent=1 // pred_fallthru
      _
    %v75 = vld [vmem:[#allocation3] sm:$0xff]
    %v76 = vld [vmem:[#allocation3 + $0x8] sm:$0xff]
    %v77 = vld [vmem:[#allocation3 + $0x10] sm:$0xff]
    %v78 = vld [vmem:[#allocation3 + $0x18] sm:$0xff]
    %v79 = vld [vmem:[#allocation3 + $0x20] sm:$0xff]
    %v80 = vld [vmem:[#allocation3 + $0x28] sm:$0xff]
    %v81 = vld [vmem:[#allocation3 + $0x30] sm:$0xff]
    %v82 = vld [vmem:[#allocation3 + $0x38] sm:$0xff]
    %v83 = vld [vmem:[#allocation3 + $0x40] sm:$0xff]
    %v84 = vld [vmem:[#allocation3 + $0x48] sm:$0xff]
    %v85 = vld [vmem:[#allocation3 + $0x50] sm:$0xff]
    %v86 = vld [vmem:[#allocation3 + $0x58] sm:$0xff]
    %v87 = vld [vmem:[#allocation3 + $0x60] sm:$0xff]
    %v88 = vld [vmem:[#allocation3 + $0x68] sm:$0xff]
    %v89 = vld [vmem:[#allocation3 + $0x70] sm:$0xff]
    %v90 = vld [vmem:[#allocation3 + $0x78] sm:$0xff]
    %v91 = vld [vmem:[%s1] sm:$0xff]
    %v92 = vld [vmem:[%s1 + $0x8] sm:$0xff]
    %v93 = vld [vmem:[%s1 + $0x10] sm:$0xff]
    %v94 = vld [vmem:[%s1 + $0x18] sm:$0xff]
    %v95 = vld [vmem:[%s1 + $0x20] sm:$0xff]
    %v96 = vld [vmem:[%s1 + $0x28] sm:$0xff]
    %v97 = vld [vmem:[%s1 + $0x30] sm:$0xff]
    %v98 = vld [vmem:[%s1 + $0x38] sm:$0xff]
    %v99 = vld [vmem:[%s1 + $0x40] sm:$0xff]
    %v100 = vld [vmem:[%s1 + $0x48] sm:$0xff]
    %v101 = vld [vmem:[%s1 + $0x50] sm:$0xff]
    %v102 = vld [vmem:[%s1 + $0x58] sm:$0xff]
    %v103 = vld [vmem:[%s1 + $0x60] sm:$0xff]
    %v104 = vld [vmem:[%s1 + $0x68] sm:$0xff]
    %v105 = vld [vmem:[%s1 + $0x70] sm:$0xff]
    %v106 = vld [vmem:[%s1 + $0x78] sm:$0xff]
    %v107 = vld [vmem:[%s3] sm:$0xff]
    %v108 = vld [vmem:[%s3 + $0x8] sm:$0xff]
    %v109 = vld [vmem:[%s3 + $0x10] sm:$0xff]
    %v110 = vld [vmem:[%s3 + $0x18] sm:$0xff]
    %v111 = vld [vmem:[%s3 + $0x20] sm:$0xff]
    %v112 = vld [vmem:[%s3 + $0x28] sm:$0xff]
    %v113 = vld [vmem:[%s3 + $0x30] sm:$0xff]
    %v114 = vld [vmem:[%s3 + $0x38] sm:$0xff]
    %v115 = vld [vmem:[%s3 + $0x40] sm:$0xff]
    %v116 = vld [vmem:[%s3 + $0x48] sm:$0xff]
    %v117 = vld [vmem:[%s3 + $0x50] sm:$0xff]
    %v118 = vld [vmem:[%s3 + $0x58] sm:$0xff]
    %v119 = vld [vmem:[%s3 + $0x60] sm:$0xff]
    %v120 = vld [vmem:[%s3 + $0x68] sm:$0xff]
    %v121 = vld [vmem:[%s3 + $0x70] sm:$0xff]
    %v122 = vld [vmem:[%s3 + $0x78] sm:$0xff]
    %v123 = vld [vmem:[%s4] sm:$0x1]
    %v124 = vld [vmem:[%s5] sm:$0xff]
    %v125 = vld [vmem:[%s5 + $0x8] sm:$0xff]
    %v126 = vld [vmem:[%s5 + $0x10] sm:$0xff]
    %v127 = vld [vmem:[%s5 + $0x18] sm:$0xff]
    %v128 = vld [vmem:[%s5 + $0x20] sm:$0xff]
    %v129 = vld [vmem:[%s5 + $0x28] sm:$0xff]
    %v130 = vld [vmem:[%s5 + $0x30] sm:$0xff]
    %v131 = vld [vmem:[%s5 + $0x38] sm:$0xff]
    %v132 = vld [vmem:[%s5 + $0x40] sm:$0xff]
    %v133 = vld [vmem:[%s5 + $0x48] sm:$0xff]
    %v134 = vld [vmem:[%s5 + $0x50] sm:$0xff]
    %v135 = vld [vmem:[%s5 + $0x58] sm:$0xff]
    %v136 = vld [vmem:[%s5 + $0x60] sm:$0xff]
    %v137 = vld [vmem:[%s5 + $0x68] sm:$0xff]
    %v138 = vld [vmem:[%s5 + $0x70] sm:$0xff]
    %v139 = vld [vmem:[%s5 + $0x78] sm:$0xff]
    %v140 = vld [vmem:[%s6] sm:$0x1]
    %141 = vmatprep.subr.mxu0 0.0
    %142 = vmatpush1.msra.mxu0 %v91
    %143 = vmatprep.subr.mxu0 0.0
    %144 = vmatpush1.msra.mxu0 %v92
    %145 = vmatprep.subr.mxu0 0.0
    %146 = vmatpush1.msra.mxu0 %v93
    %147 = vmatprep.subr.mxu0 0.0
    %148 = vmatpush1.msra.mxu0 %v94
    %149 = vmatprep.subr.mxu0 0.0
    %150 = vmatpush1.msra.mxu0 %v95
    %151 = vmatprep.subr.mxu0 0.0
    %152 = vmatpush1.msra.mxu0 %v96
    %153 = vmatprep.subr.mxu0 0.0
    %154 = vmatpush1.msra.mxu0 %v97
    %155 = vmatprep.subr.mxu0 0.0
    %156 = vmatpush1.msra.mxu0 %v98
    %157 = vmatprep.subr.mxu0 0.0
    %158 = vmatpush1.msra.mxu0 %v99
    %159 = vmatprep.subr.mxu0 0.0
    %160 = vmatpush1.msra.mxu0 %v100
    %161 = vmatprep.subr.mxu0 0.0
    %162 = vmatpush1.msra.mxu0 %v101
    %163 = vmatprep.subr.mxu0 0.0
    %164 = vmatpush1.msra.mxu0 %v102
    %165 = vmatprep.subr.mxu0 0.0
    %166 = vmatpush1.msra.mxu0 %v103
    %167 = vmatprep.subr.mxu0 0.0
    %168 = vmatpush1.msra.mxu0 %v104
    %169 = vmatprep.subr.mxu0 0.0
    %170 = vmatpush1.msra.mxu0 %v105
    %171 = vmatprep.subr.mxu0 0.0
    %172 = vmatpush1.msra.mxu0 %v106
    %173 = vmatprep.subr.mxu0 0.0
    %174 = vmatpush1.msra.mxu0 0.0
    %175 = vmatprep.subr.mxu0 0.0
    %176 = vmatpush1.msra.mxu0 0.0
    %177 = vmatprep.subr.mxu0 0.0
    %178 = vmatpush1.msra.mxu0 0.0
    %179 = vmatprep.subr.mxu0 0.0
    %180 = vmatpush1.msra.mxu0 0.0
    %181 = vmatprep.subr.mxu0 0.0
    %182 = vmatpush1.msra.mxu0 0.0
    %183 = vmatprep.subr.mxu0 0.0
    %184 = vmatpush1.msra.mxu0 0.0
    %185 = vmatprep.subr.mxu0 0.0
    %186 = vmatpush1.msra.mxu0 0.0
    %187 = vmatprep.subr.mxu0 0.0
    %188 = vmatpush1.msra.mxu0 0.0
    %189 = vmatprep.subr.mxu0 0.0
    %190 = vmatpush1.msra.mxu0 0.0
    %191 = vmatprep.subr.mxu0 0.0
    %192 = vmatpush1.msra.mxu0 0.0
    %193 = vmatprep.subr.mxu0 0.0
    %194 = vmatpush1.msra.mxu0 0.0
    %195 = vmatprep.subr.mxu0 0.0
    %196 = vmatpush1.msra.mxu0 0.0
    %197 = vmatprep.subr.mxu0 0.0
    %198 = vmatpush1.msra.mxu0 0.0
    %199 = vmatprep.subr.mxu0 0.0
    %200 = vmatpush1.msra.mxu0 0.0
    %201 = vmatprep.subr.mxu0 0.0
    %202 = vmatpush1.msra.mxu0 0.0
    %203 = vmatprep.subr.mxu0 0.0
    %204 = vmatpush1.msra.mxu0 0.0
    %205 = vmatprep.mubr.f32.mxu0 0.0
    %206 = vmatmul.mubr.f32.gmra.mrb[0].mxu0 %v75
    %v207 = vpop.f32.mrb[0].mxu0
    %v208 = vadd.f32 0.0, %v207
    %v209 = vpop.f32.mrb[0].mxu0
    %210 = vmatprep.mubr.f32.mxu0 0.0
    %211 = vmatmul.mubr.f32.gmra.mrb[0].mxu0 %v76
    %v212 = vpop.f32.mrb[0].mxu0
    %v213 = vadd.f32 0.0, %v212
    %v214 = vpop.f32.mrb[0].mxu0
    %215 = vmatprep.mubr.f32.mxu0 0.0
    %216 = vmatmul.mubr.f32.gmra.mrb[0].mxu0 %v77
    %v217 = vpop.f32.mrb[0].mxu0
    %v218 = vadd.f32 0.0, %v217
    %v219 = vpop.f32.mrb[0].mxu0
    %220 = vmatprep.mubr.f32.mxu0 0.0
    %221 = vmatmul.mubr.f32.gmra.mrb[0].mxu0 %v78
    %v222 = vpop.f32.mrb[0].mxu0
    %v223 = vadd.f32 0.0, %v222
    %v224 = vpop.f32.mrb[0].mxu0
    %225 = vmatprep.mubr.f32.mxu0 0.0
    %226 = vmatmul.mubr.f32.gmra.mrb[0].mxu0 %v79
    %v227 = vpop.f32.mrb[0].mxu0
    %v228 = vadd.f32 0.0, %v227
    %v229 = vpop.f32.mrb[0].mxu0
    %230 = vmatprep.mubr.f32.mxu0 0.0
    %231 = vmatmul.mubr.f32.gmra.mrb[0].mxu0 %v80
    %v232 = vpop.f32.mrb[0].mxu0
    %v233 = vadd.f32 0.0, %v232
    %v234 = vpop.f32.mrb[0].mxu0
    %235 = vmatprep.mubr.f32.mxu0 0.0
    %236 = vmatmul.mubr.f32.gmra.mrb[0].mxu0 %v81
    %v237 = vpop.f32.mrb[0].mxu0
    %v238 = vadd.f32 0.0, %v237
    %v239 = vpop.f32.mrb[0].mxu0
    %240 = vmatprep.mubr.f32.mxu0 0.0
    %241 = vmatmul.mubr.f32.gmra.mrb[0].mxu0 %v82
    %v242 = vpop.f32.mrb[0].mxu0
    %v243 = vadd.f32 0.0, %v242
    %v244 = vpop.f32.mrb[0].mxu0
    %245 = vmatprep.mubr.f32.mxu0 0.0
    %246 = vmatmul.mubr.f32.gmra.mrb[0].mxu0 %v83
    %v247 = vpop.f32.mrb[0].mxu0
    %v248 = vadd.f32 0.0, %v247
    %v249 = vpop.f32.mrb[0].mxu0
    %250 = vmatprep.mubr.f32.mxu0 0.0
    %251 = vmatmul.mubr.f32.gmra.mrb[0].mxu0 %v84
    %v252 = vpop.f32.mrb[0].mxu0
    %v253 = vadd.f32 0.0, %v252
    %v254 = vpop.f32.mrb[0].mxu0
    %255 = vmatprep.mubr.f32.mxu0 0.0
    %256 = vmatmul.mubr.f32.gmra.mrb[0].mxu0 %v85
    %v257 = vpop.f32.mrb[0].mxu0
    %v258 = vadd.f32 0.0, %v257
    %v259 = vpop.f32.mrb[0].mxu0
    %260 = vmatprep.mubr.f32.mxu0 0.0
    %261 = vmatmul.mubr.f32.gmra.mrb[0].mxu0 %v86
    %v262 = vpop.f32.mrb[0].mxu0
    %v263 = vadd.f32 0.0, %v262
    %v264 = vpop.f32.mrb[0].mxu0
    %265 = vmatprep.mubr.f32.mxu0 0.0
    %266 = vmatmul.mubr.f32.gmra.mrb[0].mxu0 %v87
    %v267 = vpop.f32.mrb[0].mxu0
    %v268 = vadd.f32 0.0, %v267
    %v269 = vpop.f32.mrb[0].mxu0
    %270 = vmatprep.mubr.f32.mxu0 0.0
    %271 = vmatmul.mubr.f32.gmra.mrb[0].mxu0 %v88
    %v272 = vpop.f32.mrb[0].mxu0
    %v273 = vadd.f32 0.0, %v272
    %v274 = vpop.f32.mrb[0].mxu0
    %275 = vmatprep.mubr.f32.mxu0 0.0
    %276 = vmatmul.mubr.f32.gmra.mrb[0].mxu0 %v89
    %v277 = vpop.f32.mrb[0].mxu0
    %v278 = vadd.f32 0.0, %v277
    %v279 = vpop.f32.mrb[0].mxu0
    %280 = vmatprep.mubr.f32.mxu0 0.0
    %281 = vmatmul.mubr.f32.gmra.mrb[0].mxu0 %v90
    %v282 = vpop.f32.mrb[0].mxu0
    %v283 = vadd.f32 0.0, %v282
    %v284 = vpop.f32.mrb[0].mxu0
    %285 = vdwg.mxu0
    %v287 = vlaneseq
    %v288 = vshrl.u32 %v287, 7
    %v289 = vsub.s32 0, %v288
    %v290 = vrot.slane %v123, %v289
    %292 = vmatprep.subr.mxu0 0.0
    %293 = vmatpush1.msra.mxu0 %v107
    %294 = vmatprep.subr.mxu0 0.0
    %295 = vmatpush1.msra.mxu0 %v108
    %296 = vmatprep.subr.mxu0 0.0
    %297 = vmatpush1.msra.mxu0 %v109
    %298 = vmatprep.subr.mxu0 0.0
    %299 = vmatpush1.msra.mxu0 %v110
    %300 = vmatprep.subr.mxu0 0.0
    %301 = vmatpush1.msra.mxu0 %v111
    %302 = vmatprep.subr.mxu0 0.0
    %303 = vmatpush1.msra.mxu0 %v112
    %304 = vmatprep.subr.mxu0 0.0
    %305 = vmatpush1.msra.mxu0 %v113
    %306 = vmatprep.subr.mxu0 0.0
    %307 = vmatpush1.msra.mxu0 %v114
    %308 = vmatprep.subr.mxu0 0.0
    %309 = vmatpush1.msra.mxu0 %v115
    %310 = vmatprep.subr.mxu0 0.0
    %311 = vmatpush1.msra.mxu0 %v116
    %312 = vmatprep.subr.mxu0 0.0
    %313 = vmatpush1.msra.mxu0 %v117
    %314 = vmatprep.subr.mxu0 0.0
    %315 = vmatpush1.msra.mxu0 %v118
    %316 = vmatprep.subr.mxu0 0.0
    %317 = vmatpush1.msra.mxu0 %v119
    %318 = vmatprep.subr.mxu0 0.0
    %319 = vmatpush1.msra.mxu0 %v120
    %320 = vmatprep.subr.mxu0 0.0
    %321 = vmatpush1.msra.mxu0 %v121
    %322 = vmatprep.subr.mxu0 0.0
    %323 = vmatpush1.msra.mxu0 %v122
    %324 = vmatprep.subr.mxu0 0.0
    %325 = vmatpush1.msra.mxu0 0.0
    %326 = vmatprep.subr.mxu0 0.0
    %327 = vmatpush1.msra.mxu0 0.0
    %328 = vmatprep.subr.mxu0 0.0
    %329 = vmatpush1.msra.mxu0 0.0
    %330 = vmatprep.subr.mxu0 0.0
    %331 = vmatpush1.msra.mxu0 0.0
    %332 = vmatprep.subr.mxu0 0.0
    %333 = vmatpush1.msra.mxu0 0.0
    %334 = vmatprep.subr.mxu0 0.0
    %335 = vmatpush1.msra.mxu0 0.0
    %336 = vmatprep.subr.mxu0 0.0
    %337 = vmatpush1.msra.mxu0 0.0
    %338 = vmatprep.subr.mxu0 0.0
    %339 = vmatpush1.msra.mxu0 0.0
    %340 = vmatprep.subr.mxu0 0.0
    %341 = vmatpush1.msra.mxu0 0.0
    %342 = vmatprep.subr.mxu0 0.0
    %343 = vmatpush1.msra.mxu0 0.0
    %344 = vmatprep.subr.mxu0 0.0
    %345 = vmatpush1.msra.mxu0 0.0
    %346 = vmatprep.subr.mxu0 0.0
    %347 = vmatpush1.msra.mxu0 0.0
    %348 = vmatprep.subr.mxu0 0.0
    %349 = vmatpush1.msra.mxu0 0.0
    %350 = vmatprep.subr.mxu0 0.0
    %351 = vmatpush1.msra.mxu0 0.0
    %352 = vmatprep.subr.mxu0 0.0
    %353 = vmatpush1.msra.mxu0 0.0
    %354 = vmatprep.subr.mxu0 0.0
    %355 = vmatpush1.msra.mxu0 0.0
    %356 = vmatprep.mubr.f32.mxu0 0.0
    %357 = vmatmul.mubr.f32.gmra.mrb[0].mxu0 %v208
    %v358 = vpop.f32.mrb[0].mxu0
    %v359 = vadd.f32 %v290, %v358
    %v360 = vpop.f32.mrb[0].mxu0
    %361 = vmatprep.mubr.f32.mxu0 0.0
    %362 = vmatmul.mubr.f32.gmra.mrb[0].mxu0 %v213
    %v363 = vpop.f32.mrb[0].mxu0
    %v364 = vadd.f32 %v290, %v363
    %v365 = vpop.f32.mrb[0].mxu0
    %366 = vmatprep.mubr.f32.mxu0 0.0
    %367 = vmatmul.mubr.f32.gmra.mrb[0].mxu0 %v218
    %v368 = vpop.f32.mrb[0].mxu0
    %v369 = vadd.f32 %v290, %v368
    %v370 = vpop.f32.mrb[0].mxu0
    %371 = vmatprep.mubr.f32.mxu0 0.0
    %372 = vmatmul.mubr.f32.gmra.mrb[0].mxu0 %v223
    %v373 = vpop.f32.mrb[0].mxu0
    %v374 = vadd.f32 %v290, %v373
    %v375 = vpop.f32.mrb[0].mxu0
    %376 = vmatprep.mubr.f32.mxu0 0.0
    %377 = vmatmul.mubr.f32.gmra.mrb[0].mxu0 %v228
    %v378 = vpop.f32.mrb[0].mxu0
    %v379 = vadd.f32 %v290, %v378
    %v380 = vpop.f32.mrb[0].mxu0
    %381 = vmatprep.mubr.f32.mxu0 0.0
    %382 = vmatmul.mubr.f32.gmra.mrb[0].mxu0 %v233
    %v383 = vpop.f32.mrb[0].mxu0
    %v384 = vadd.f32 %v290, %v383
    %v385 = vpop.f32.mrb[0].mxu0
    %386 = vmatprep.mubr.f32.mxu0 0.0
    %387 = vmatmul.mubr.f32.gmra.mrb[0].mxu0 %v238
    %v388 = vpop.f32.mrb[0].mxu0
    %v389 = vadd.f32 %v290, %v388
    %v390 = vpop.f32.mrb[0].mxu0
    %391 = vmatprep.mubr.f32.mxu0 0.0
    %392 = vmatmul.mubr.f32.gmra.mrb[0].mxu0 %v243
    %v393 = vpop.f32.mrb[0].mxu0
    %v394 = vadd.f32 %v290, %v393
    %v395 = vpop.f32.mrb[0].mxu0
    %396 = vmatprep.mubr.f32.mxu0 0.0
    %397 = vmatmul.mubr.f32.gmra.mrb[0].mxu0 %v248
    %v398 = vpop.f32.mrb[0].mxu0
    %v399 = vadd.f32 %v290, %v398
    %v400 = vpop.f32.mrb[0].mxu0
    %401 = vmatprep.mubr.f32.mxu0 0.0
    %402 = vmatmul.mubr.f32.gmra.mrb[0].mxu0 %v253
    %v403 = vpop.f32.mrb[0].mxu0
    %v404 = vadd.f32 %v290, %v403
    %v405 = vpop.f32.mrb[0].mxu0
    %406 = vmatprep.mubr.f32.mxu0 0.0
    %407 = vmatmul.mubr.f32.gmra.mrb[0].mxu0 %v258
    %v408 = vpop.f32.mrb[0].mxu0
    %v409 = vadd.f32 %v290, %v408
    %v410 = vpop.f32.mrb[0].mxu0
    %411 = vmatprep.mubr.f32.mxu0 0.0
    %412 = vmatmul.mubr.f32.gmra.mrb[0].mxu0 %v263
    %v413 = vpop.f32.mrb[0].mxu0
    %v414 = vadd.f32 %v290, %v413
    %v415 = vpop.f32.mrb[0].mxu0
    %416 = vmatprep.mubr.f32.mxu0 0.0
    %417 = vmatmul.mubr.f32.gmra.mrb[0].mxu0 %v268
    %v418 = vpop.f32.mrb[0].mxu0
    %v419 = vadd.f32 %v290, %v418
    %v420 = vpop.f32.mrb[0].mxu0
    %421 = vmatprep.mubr.f32.mxu0 0.0
    %422 = vmatmul.mubr.f32.gmra.mrb[0].mxu0 %v273
    %v423 = vpop.f32.mrb[0].mxu0
    %v424 = vadd.f32 %v290, %v423
    %v425 = vpop.f32.mrb[0].mxu0
    %426 = vmatprep.mubr.f32.mxu0 0.0
    %427 = vmatmul.mubr.f32.gmra.mrb[0].mxu0 %v278
    %v428 = vpop.f32.mrb[0].mxu0
    %v429 = vadd.f32 %v290, %v428
    %v430 = vpop.f32.mrb[0].mxu0
    %431 = vmatprep.mubr.f32.mxu0 0.0
    %432 = vmatmul.mubr.f32.gmra.mrb[0].mxu0 %v283
    %v433 = vpop.f32.mrb[0].mxu0
    %v434 = vadd.f32 %v290, %v433
    %v435 = vpop.f32.mrb[0].mxu0
    %436 = vdwg.mxu0
    %v437 = vand.u32 2147483647, %v359
    %v438 = vand.u32 2147483647, %v364
    %v439 = vand.u32 2147483647, %v369
    %v440 = vand.u32 2147483647, %v374
    %v441 = vand.u32 2147483647, %v379
    %v442 = vand.u32 2147483647, %v384
    %v443 = vand.u32 2147483647, %v389
    %v444 = vand.u32 2147483647, %v394
    %v445 = vand.u32 2147483647, %v399
    %v446 = vand.u32 2147483647, %v404
    %v447 = vand.u32 2147483647, %v409
    %v448 = vand.u32 2147483647, %v414
    %v449 = vand.u32 2147483647, %v419
    %v450 = vand.u32 2147483647, %v424
    %v451 = vand.u32 2147483647, %v429
    %v452 = vand.u32 2147483647, %v434
    %vm453 = vcmp.lt.f32.partialorder %v437, 0.001
    %vm454 = vcmp.lt.f32.partialorder %v438, 0.001
    %vm455 = vcmp.lt.f32.partialorder %v439, 0.001
    %vm456 = vcmp.lt.f32.partialorder %v440, 0.001
    %vm457 = vcmp.lt.f32.partialorder %v441, 0.001
    %vm458 = vcmp.lt.f32.partialorder %v442, 0.001
    %vm459 = vcmp.lt.f32.partialorder %v443, 0.001
    %vm460 = vcmp.lt.f32.partialorder %v444, 0.001
    %vm461 = vcmp.lt.f32.partialorder %v445, 0.001
    %vm462 = vcmp.lt.f32.partialorder %v446, 0.001
    %vm463 = vcmp.lt.f32.partialorder %v447, 0.001
    %vm464 = vcmp.lt.f32.partialorder %v448, 0.001
    %vm465 = vcmp.lt.f32.partialorder %v449, 0.001
    %vm466 = vcmp.lt.f32.partialorder %v450, 0.001
    %vm467 = vcmp.lt.f32.partialorder %v451, 0.001
    %vm468 = vcmp.lt.f32.partialorder %v452, 0.001
    %v469 = vmul.f32 %v359, 0.5
    %v470 = vmul.f32 %v364, 0.5
    %v471 = vmul.f32 %v369, 0.5
    %v472 = vmul.f32 %v374, 0.5
    %v473 = vmul.f32 %v379, 0.5
    %v474 = vmul.f32 %v384, 0.5
    %v475 = vmul.f32 %v389, 0.5
    %v476 = vmul.f32 %v394, 0.5
    %v477 = vmul.f32 %v399, 0.5
    %v478 = vmul.f32 %v404, 0.5
    %v479 = vmul.f32 %v409, 0.5
    %v480 = vmul.f32 %v414, 0.5
    %v481 = vmul.f32 %v419, 0.5
    %v482 = vmul.f32 %v424, 0.5
    %v483 = vmul.f32 %v429, 0.5
    %v484 = vmul.f32 %v434, 0.5
    %v485 = vmul.f32 %v469, %v359
    %v486 = vmul.f32 %v470, %v364
    %v487 = vmul.f32 %v471, %v369
    %v488 = vmul.f32 %v472, %v374
    %v489 = vmul.f32 %v473, %v379
    %v490 = vmul.f32 %v474, %v384
    %v491 = vmul.f32 %v475, %v389
    %v492 = vmul.f32 %v476, %v394
    %v493 = vmul.f32 %v477, %v399
    %v494 = vmul.f32 %v478, %v404
    %v495 = vmul.f32 %v479, %v409
    %v496 = vmul.f32 %v480, %v414
    %v497 = vmul.f32 %v481, %v419
    %v498 = vmul.f32 %v482, %v424
    %v499 = vmul.f32 %v483, %v429
    %v500 = vmul.f32 %v484, %v434
    %v501 = vadd.f32 %v359, %v485
    %v502 = vadd.f32 %v364, %v486
    %v503 = vadd.f32 %v369, %v487
    %v504 = vadd.f32 %v374, %v488
    %v505 = vadd.f32 %v379, %v489
    %v506 = vadd.f32 %v384, %v490
    %v507 = vadd.f32 %v389, %v491
    %v508 = vadd.f32 %v394, %v492
    %v509 = vadd.f32 %v399, %v493
    %v510 = vadd.f32 %v404, %v494
    %v511 = vadd.f32 %v409, %v495
    %v512 = vadd.f32 %v414, %v496
    %v513 = vadd.f32 %v419, %v497
    %v514 = vadd.f32 %v424, %v498
    %v515 = vadd.f32 %v429, %v499
    %v516 = vadd.f32 %v434, %v500
    %v517 = vmul.f32 %v359, 1.442695
    %v518 = vpow.pop %v517
    %v519 = vmul.f32 %v364, 1.442695
    %v520 = vpow.pop %v519
    %v521 = vmul.f32 %v369, 1.442695
    %v522 = vpow.pop %v521
    %v523 = vmul.f32 %v374, 1.442695
    %v524 = vpow.pop %v523
    %v525 = vmul.f32 %v379, 1.442695
    %v526 = vpow.pop %v525
    %v527 = vmul.f32 %v384, 1.442695
    %v528 = vpow.pop %v527
    %v529 = vmul.f32 %v389, 1.442695
    %v530 = vpow.pop %v529
    %v531 = vmul.f32 %v394, 1.442695
    %v532 = vpow.pop %v531
    %v533 = vmul.f32 %v399, 1.442695
    %v534 = vpow.pop %v533
    %v535 = vmul.f32 %v404, 1.442695
    %v536 = vpow.pop %v535
    %v537 = vmul.f32 %v409, 1.442695
    %v538 = vpow.pop %v537
    %v539 = vmul.f32 %v414, 1.442695
    %v540 = vpow.pop %v539
    %v541 = vmul.f32 %v419, 1.442695
    %v542 = vpow.pop %v541
    %v543 = vmul.f32 %v424, 1.442695
    %v544 = vpow.pop %v543
    %v545 = vmul.f32 %v429, 1.442695
    %v546 = vpow.pop %v545
    %v547 = vmul.f32 %v434, 1.442695
    %v548 = vpow.pop %v547
    %v549 = vsub.f32 %v518, 1.0
    %v550 = vsub.f32 %v520, 1.0
    %v551 = vsub.f32 %v522, 1.0
    %v552 = vsub.f32 %v524, 1.0
    %v553 = vsub.f32 %v526, 1.0
    %v554 = vsub.f32 %v528, 1.0
    %v555 = vsub.f32 %v530, 1.0
    %v556 = vsub.f32 %v532, 1.0
    %v557 = vsub.f32 %v534, 1.0
    %v558 = vsub.f32 %v536, 1.0
    %v559 = vsub.f32 %v538, 1.0
    %v560 = vsub.f32 %v540, 1.0
    %v561 = vsub.f32 %v542, 1.0
    %v562 = vsub.f32 %v544, 1.0
    %v563 = vsub.f32 %v546, 1.0
    %v564 = vsub.f32 %v548, 1.0
    %v565 = vsel %vm453, %v501, %v549
    %v566 = vsel %vm454, %v502, %v550
    %v567 = vsel %vm455, %v503, %v551
    %v568 = vsel %vm456, %v504, %v552
    %v569 = vsel %vm457, %v505, %v553
    %v570 = vsel %vm458, %v506, %v554
    %v571 = vsel %vm459, %v507, %v555
    %v572 = vsel %vm460, %v508, %v556
    %v573 = vsel %vm461, %v509, %v557
    %v574 = vsel %vm462, %v510, %v558
    %v575 = vsel %vm463, %v511, %v559
    %v576 = vsel %vm464, %v512, %v560
    %v577 = vsel %vm465, %v513, %v561
    %v578 = vsel %vm466, %v514, %v562
    %v579 = vsel %vm467, %v515, %v563
    %v580 = vsel %vm468, %v516, %v564
    %vm581 = vcmp.gt.f32.partialorder %v359, 0.0
    %vm582 = vcmp.gt.f32.partialorder %v364, 0.0
    %vm583 = vcmp.gt.f32.partialorder %v369, 0.0
    %vm584 = vcmp.gt.f32.partialorder %v374, 0.0
    %vm585 = vcmp.gt.f32.partialorder %v379, 0.0
    %vm586 = vcmp.gt.f32.partialorder %v384, 0.0
    %vm587 = vcmp.gt.f32.partialorder %v389, 0.0
    %vm588 = vcmp.gt.f32.partialorder %v394, 0.0
    %vm589 = vcmp.gt.f32.partialorder %v399, 0.0
    %vm590 = vcmp.gt.f32.partialorder %v404, 0.0
    %vm591 = vcmp.gt.f32.partialorder %v409, 0.0
    %vm592 = vcmp.gt.f32.partialorder %v414, 0.0
    %vm593 = vcmp.gt.f32.partialorder %v419, 0.0
    %vm594 = vcmp.gt.f32.partialorder %v424, 0.0
    %vm595 = vcmp.gt.f32.partialorder %v429, 0.0
    %vm596 = vcmp.gt.f32.partialorder %v434, 0.0
    %v597 = vsel %vm581, %v359, %v565
    %v598 = vsel %vm582, %v364, %v566
    %v599 = vsel %vm583, %v369, %v567
    %v600 = vsel %vm584, %v374, %v568
    %v601 = vsel %vm585, %v379, %v569
    %v602 = vsel %vm586, %v384, %v570
    %v603 = vsel %vm587, %v389, %v571
    %v604 = vsel %vm588, %v394, %v572
    %v605 = vsel %vm589, %v399, %v573
    %v606 = vsel %vm590, %v404, %v574
    %v607 = vsel %vm591, %v409, %v575
    %v608 = vsel %vm592, %v414, %v576
    %v609 = vsel %vm593, %v419, %v577
    %v610 = vsel %vm594, %v424, %v578
    %v611 = vsel %vm595, %v429, %v579
    %v612 = vsel %vm596, %v434, %v580
    %v614 = vlaneseq
    %v615 = vshrl.u32 %v614, 7
    %v616 = vsub.s32 0, %v615
    %v617 = vrot.slane %v140, %v616
    %619 = vmatprep.subr.mxu0 0.0
    %620 = vmatpush1.msra.mxu0 %v124
    %621 = vmatprep.subr.mxu0 0.0
    %622 = vmatpush1.msra.mxu0 %v125
    %623 = vmatprep.subr.mxu0 0.0
    %624 = vmatpush1.msra.mxu0 %v126
    %625 = vmatprep.subr.mxu0 0.0
    %626 = vmatpush1.msra.mxu0 %v127
    %627 = vmatprep.subr.mxu0 0.0
    %628 = vmatpush1.msra.mxu0 %v128
    %629 = vmatprep.subr.mxu0 0.0
    %630 = vmatpush1.msra.mxu0 %v129
    %631 = vmatprep.subr.mxu0 0.0
    %632 = vmatpush1.msra.mxu0 %v130
    %633 = vmatprep.subr.mxu0 0.0
    %634 = vmatpush1.msra.mxu0 %v131
    %635 = vmatprep.subr.mxu0 0.0
    %636 = vmatpush1.msra.mxu0 %v132
    %637 = vmatprep.subr.mxu0 0.0
    %638 = vmatpush1.msra.mxu0 %v133
    %639 = vmatprep.subr.mxu0 0.0
    %640 = vmatpush1.msra.mxu0 %v134
    %641 = vmatprep.subr.mxu0 0.0
    %642 = vmatpush1.msra.mxu0 %v135
    %643 = vmatprep.subr.mxu0 0.0
    %644 = vmatpush1.msra.mxu0 %v136
    %645 = vmatprep.subr.mxu0 0.0
    %646 = vmatpush1.msra.mxu0 %v137
    %647 = vmatprep.subr.mxu0 0.0
    %648 = vmatpush1.msra.mxu0 %v138
    %649 = vmatprep.subr.mxu0 0.0
    %650 = vmatpush1.msra.mxu0 %v139
    %651 = vmatprep.subr.mxu0 0.0
    %652 = vmatpush1.msra.mxu0 0.0
    %653 = vmatprep.subr.mxu0 0.0
    %654 = vmatpush1.msra.mxu0 0.0
    %655 = vmatprep.subr.mxu0 0.0
    %656 = vmatpush1.msra.mxu0 0.0
    %657 = vmatprep.subr.mxu0 0.0
    %658 = vmatpush1.msra.mxu0 0.0
    %659 = vmatprep.subr.mxu0 0.0
    %660 = vmatpush1.msra.mxu0 0.0
    %661 = vmatprep.subr.mxu0 0.0
    %662 = vmatpush1.msra.mxu0 0.0
    %663 = vmatprep.subr.mxu0 0.0
    %664 = vmatpush1.msra.mxu0 0.0
    %665 = vmatprep.subr.mxu0 0.0
    %666 = vmatpush1.msra.mxu0 0.0
    %667 = vmatprep.subr.mxu0 0.0
    %668 = vmatpush1.msra.mxu0 0.0
    %669 = vmatprep.subr.mxu0 0.0
    %670 = vmatpush1.msra.mxu0 0.0
    %671 = vmatprep.subr.mxu0 0.0
    %672 = vmatpush1.msra.mxu0 0.0
    %673 = vmatprep.subr.mxu0 0.0
    %674 = vmatpush1.msra.mxu0 0.0
    %675 = vmatprep.subr.mxu0 0.0
    %676 = vmatpush1.msra.mxu0 0.0
    %677 = vmatprep.subr.mxu0 0.0
    %678 = vmatpush1.msra.mxu0 0.0
    %679 = vmatprep.subr.mxu0 0.0
    %680 = vmatpush1.msra.mxu0 0.0
    %681 = vmatprep.subr.mxu0 0.0
    %682 = vmatpush1.msra.mxu0 0.0
    %683 = vmatprep.mubr.f32.mxu0 0.0
    %684 = vmatmul.mubr.f32.gmra.mrb[0].mxu0 %v597
    %v685 = vpop.f32.mrb[0].mxu0
    %v686 = vadd.f32 %v617, %v685
    %v687 = vpop.f32.mrb[0].mxu0
    %688 = vmatprep.mubr.f32.mxu0 0.0
    %689 = vmatmul.mubr.f32.gmra.mrb[0].mxu0 %v598
    %v690 = vpop.f32.mrb[0].mxu0
    %v691 = vadd.f32 %v617, %v690
    %v692 = vpop.f32.mrb[0].mxu0
    %693 = vmatprep.mubr.f32.mxu0 0.0
    %694 = vmatmul.mubr.f32.gmra.mrb[0].mxu0 %v599
    %v695 = vpop.f32.mrb[0].mxu0
    %v696 = vadd.f32 %v617, %v695
    %v697 = vpop.f32.mrb[0].mxu0
    %698 = vmatprep.mubr.f32.mxu0 0.0
    %699 = vmatmul.mubr.f32.gmra.mrb[0].mxu0 %v600
    %v700 = vpop.f32.mrb[0].mxu0
    %v701 = vadd.f32 %v617, %v700
    %v702 = vpop.f32.mrb[0].mxu0
    %703 = vmatprep.mubr.f32.mxu0 0.0
    %704 = vmatmul.mubr.f32.gmra.mrb[0].mxu0 %v601
    %v705 = vpop.f32.mrb[0].mxu0
    %v706 = vadd.f32 %v617, %v705
    %v707 = vpop.f32.mrb[0].mxu0
    %708 = vmatprep.mubr.f32.mxu0 0.0
    %709 = vmatmul.mubr.f32.gmra.mrb[0].mxu0 %v602
    %v710 = vpop.f32.mrb[0].mxu0
    %v711 = vadd.f32 %v617, %v710
    %v712 = vpop.f32.mrb[0].mxu0
    %713 = vmatprep.mubr.f32.mxu0 0.0
    %714 = vmatmul.mubr.f32.gmra.mrb[0].mxu0 %v603
    %v715 = vpop.f32.mrb[0].mxu0
    %v716 = vadd.f32 %v617, %v715
    %v717 = vpop.f32.mrb[0].mxu0
    %718 = vmatprep.mubr.f32.mxu0 0.0
    %719 = vmatmul.mubr.f32.gmra.mrb[0].mxu0 %v604
    %v720 = vpop.f32.mrb[0].mxu0
    %v721 = vadd.f32 %v617, %v720
    %v722 = vpop.f32.mrb[0].mxu0
    %723 = vmatprep.mubr.f32.mxu0 0.0
    %724 = vmatmul.mubr.f32.gmra.mrb[0].mxu0 %v605
    %v725 = vpop.f32.mrb[0].mxu0
    %v726 = vadd.f32 %v617, %v725
    %v727 = vpop.f32.mrb[0].mxu0
    %728 = vmatprep.mubr.f32.mxu0 0.0
    %729 = vmatmul.mubr.f32.gmra.mrb[0].mxu0 %v606
    %v730 = vpop.f32.mrb[0].mxu0
    %v731 = vadd.f32 %v617, %v730
    %v732 = vpop.f32.mrb[0].mxu0
    %733 = vmatprep.mubr.f32.mxu0 0.0
    %734 = vmatmul.mubr.f32.gmra.mrb[0].mxu0 %v607
    %v735 = vpop.f32.mrb[0].mxu0
    %v736 = vadd.f32 %v617, %v735
    %v737 = vpop.f32.mrb[0].mxu0
    %738 = vmatprep.mubr.f32.mxu0 0.0
    %739 = vmatmul.mubr.f32.gmra.mrb[0].mxu0 %v608
    %v740 = vpop.f32.mrb[0].mxu0
    %v741 = vadd.f32 %v617, %v740
    %v742 = vpop.f32.mrb[0].mxu0
    %743 = vmatprep.mubr.f32.mxu0 0.0
    %744 = vmatmul.mubr.f32.gmra.mrb[0].mxu0 %v609
    %v745 = vpop.f32.mrb[0].mxu0
    %v746 = vadd.f32 %v617, %v745
    %v747 = vpop.f32.mrb[0].mxu0
    %748 = vmatprep.mubr.f32.mxu0 0.0
    %749 = vmatmul.mubr.f32.gmra.mrb[0].mxu0 %v610
    %v750 = vpop.f32.mrb[0].mxu0
    %v751 = vadd.f32 %v617, %v750
    %v752 = vpop.f32.mrb[0].mxu0
    %753 = vmatprep.mubr.f32.mxu0 0.0
    %754 = vmatmul.mubr.f32.gmra.mrb[0].mxu0 %v611
    %v755 = vpop.f32.mrb[0].mxu0
    %v756 = vadd.f32 %v617, %v755
    %v757 = vpop.f32.mrb[0].mxu0
    %758 = vmatprep.mubr.f32.mxu0 0.0
    %759 = vmatmul.mubr.f32.gmra.mrb[0].mxu0 %v612
    %v760 = vpop.f32.mrb[0].mxu0
    %v761 = vadd.f32 %v617, %v760
    %v762 = vpop.f32.mrb[0].mxu0
    %763 = vdwg.mxu0
    %v764 = vld [vmem:[%s7] sm:$0xff]
    %v765 = vld [vmem:[%s7 + $0x8] sm:$0xff]
    %v766 = vld [vmem:[%s7 + $0x10] sm:$0xff]
    %v767 = vld [vmem:[%s7 + $0x18] sm:$0xff]
    %v768 = vld [vmem:[%s7 + $0x20] sm:$0xff]
    %v769 = vld [vmem:[%s7 + $0x28] sm:$0xff]
    %v770 = vld [vmem:[%s7 + $0x30] sm:$0xff]
    %v771 = vld [vmem:[%s7 + $0x38] sm:$0xff]
    %v772 = vld [vmem:[%s7 + $0x40] sm:$0xff]
    %v773 = vld [vmem:[%s7 + $0x48] sm:$0xff]
    %v774 = vld [vmem:[%s7 + $0x50] sm:$0xff]
    %v775 = vld [vmem:[%s7 + $0x58] sm:$0xff]
    %v776 = vld [vmem:[%s7 + $0x60] sm:$0xff]
    %v777 = vld [vmem:[%s7 + $0x68] sm:$0xff]
    %v778 = vld [vmem:[%s7 + $0x70] sm:$0xff]
    %v779 = vld [vmem:[%s7 + $0x78] sm:$0xff]
    %v780 = vld [vmem:[%s8] sm:$0x1]
    %v781 = vld [vmem:[%s9] sm:$0xff]
    %v782 = vld [vmem:[%s9 + $0x8] sm:$0xff]
    %v783 = vld [vmem:[%s9 + $0x10] sm:$0xff]
    %v784 = vld [vmem:[%s9 + $0x18] sm:$0xff]
    %v785 = vld [vmem:[%s9 + $0x20] sm:$0xff]
    %v786 = vld [vmem:[%s9 + $0x28] sm:$0xff]
    %v787 = vld [vmem:[%s9 + $0x30] sm:$0xff]
    %v788 = vld [vmem:[%s9 + $0x38] sm:$0xff]
    %v789 = vld [vmem:[%s9 + $0x40] sm:$0xff]
    %v790 = vld [vmem:[%s9 + $0x48] sm:$0xff]
    %v791 = vld [vmem:[%s9 + $0x50] sm:$0xff]
    %v792 = vld [vmem:[%s9 + $0x58] sm:$0xff]
    %v793 = vld [vmem:[%s9 + $0x60] sm:$0xff]
    %v794 = vld [vmem:[%s9 + $0x68] sm:$0xff]
    %v795 = vld [vmem:[%s9 + $0x70] sm:$0xff]
    %v796 = vld [vmem:[%s9 + $0x78] sm:$0xff]
    %v797 = vld [vmem:[%s10] sm:$0x1]
    %798 = vmatprep.subr.mxu0 0.0
    %799 = vmatpush1.msra.mxu0 %v686
    %800 = vmatprep.subr.mxu0 0.0
    %801 = vmatpush1.msra.mxu0 %v691
    %802 = vmatprep.subr.mxu0 0.0
    %803 = vmatpush1.msra.mxu0 %v696
    %804 = vmatprep.subr.mxu0 0.0
    %805 = vmatpush1.msra.mxu0 %v701
    %806 = vmatprep.subr.mxu0 0.0
    %807 = vmatpush1.msra.mxu0 %v706
    %808 = vmatprep.subr.mxu0 0.0
    %809 = vmatpush1.msra.mxu0 %v711
    %810 = vmatprep.subr.mxu0 0.0
    %811 = vmatpush1.msra.mxu0 %v716
    %812 = vmatprep.subr.mxu0 0.0
    %813 = vmatpush1.msra.mxu0 %v721
    %814 = vmatprep.subr.mxu0 0.0
    %815 = vmatpush1.msra.mxu0 %v726
    %816 = vmatprep.subr.mxu0 0.0
    %817 = vmatpush1.msra.mxu0 %v731
    %818 = vmatprep.subr.mxu0 0.0
    %819 = vmatpush1.msra.mxu0 %v736
    %820 = vmatprep.subr.mxu0 0.0
    %821 = vmatpush1.msra.mxu0 %v741
    %822 = vmatprep.subr.mxu0 0.0
    %823 = vmatpush1.msra.mxu0 %v746
    %824 = vmatprep.subr.mxu0 0.0
    %825 = vmatpush1.msra.mxu0 %v751
    %826 = vmatprep.subr.mxu0 0.0
    %827 = vmatpush1.msra.mxu0 %v756
    %828 = vmatprep.subr.mxu0 0.0
    %829 = vmatpush1.msra.mxu0 %v761
    %830 = vmatprep.subr.mxu0 0.0
    %831 = vmatpush1.msra.mxu0 0.0
    %832 = vmatprep.subr.mxu0 0.0
    %833 = vmatpush1.msra.mxu0 0.0
    %834 = vmatprep.subr.mxu0 0.0
    %835 = vmatpush1.msra.mxu0 0.0
    %836 = vmatprep.subr.mxu0 0.0
    %837 = vmatpush1.msra.mxu0 0.0
    %838 = vmatprep.subr.mxu0 0.0
    %839 = vmatpush1.msra.mxu0 0.0
    %840 = vmatprep.subr.mxu0 0.0
    %841 = vmatpush1.msra.mxu0 0.0
    %842 = vmatprep.subr.mxu0 0.0
    %843 = vmatpush1.msra.mxu0 0.0
    %844 = vmatprep.subr.mxu0 0.0
    %845 = vmatpush1.msra.mxu0 0.0
    %846 = vmatprep.subr.mxu0 0.0
    %847 = vmatpush1.msra.mxu0 0.0
    %848 = vmatprep.subr.mxu0 0.0
    %849 = vmatpush1.msra.mxu0 0.0
    %850 = vmatprep.subr.mxu0 0.0
    %851 = vmatpush1.msra.mxu0 0.0
    %852 = vmatprep.subr.mxu0 0.0
    %853 = vmatpush1.msra.mxu0 0.0
    %854 = vmatprep.subr.mxu0 0.0
    %855 = vmatpush1.msra.mxu0 0.0
    %856 = vmatprep.subr.mxu0 0.0
    %857 = vmatpush1.msra.mxu0 0.0
    %858 = vmatprep.subr.mxu0 0.0
    %859 = vmatpush1.msra.mxu0 0.0
    %860 = vmatprep.subr.mxu0 0.0
    %861 = vmatpush1.msra.mxu0 0.0
    %862 = vmatprep.mubr.f32.mxu0 0.0
    %863 = vmatmul.mubr.f32.gmra.mrb[0].mxu0 %v75
    %v864 = vpop.f32.mrb[0].mxu0
    %v865 = vadd.f32 0.0, %v864
    %v866 = vpop.f32.mrb[0].mxu0
    %867 = vmatprep.mubr.f32.mxu0 0.0
    %868 = vmatmul.mubr.f32.gmra.mrb[0].mxu0 %v76
    %v869 = vpop.f32.mrb[0].mxu0
    %v870 = vadd.f32 0.0, %v869
    %v871 = vpop.f32.mrb[0].mxu0
    %872 = vmatprep.mubr.f32.mxu0 0.0
    %873 = vmatmul.mubr.f32.gmra.mrb[0].mxu0 %v77
    %v874 = vpop.f32.mrb[0].mxu0
    %v875 = vadd.f32 0.0, %v874
    %v876 = vpop.f32.mrb[0].mxu0
    %877 = vmatprep.mubr.f32.mxu0 0.0
    %878 = vmatmul.mubr.f32.gmra.mrb[0].mxu0 %v78
    %v879 = vpop.f32.mrb[0].mxu0
    %v880 = vadd.f32 0.0, %v879
    %v881 = vpop.f32.mrb[0].mxu0
    %882 = vmatprep.mubr.f32.mxu0 0.0
    %883 = vmatmul.mubr.f32.gmra.mrb[0].mxu0 %v79
    %v884 = vpop.f32.mrb[0].mxu0
    %v885 = vadd.f32 0.0, %v884
    %v886 = vpop.f32.mrb[0].mxu0
    %887 = vmatprep.mubr.f32.mxu0 0.0
    %888 = vmatmul.mubr.f32.gmra.mrb[0].mxu0 %v80
    %v889 = vpop.f32.mrb[0].mxu0
    %v890 = vadd.f32 0.0, %v889
    %v891 = vpop.f32.mrb[0].mxu0
    %892 = vmatprep.mubr.f32.mxu0 0.0
    %893 = vmatmul.mubr.f32.gmra.mrb[0].mxu0 %v81
    %v894 = vpop.f32.mrb[0].mxu0
    %v895 = vadd.f32 0.0, %v894
    %v896 = vpop.f32.mrb[0].mxu0
    %897 = vmatprep.mubr.f32.mxu0 0.0
    %898 = vmatmul.mubr.f32.gmra.mrb[0].mxu0 %v82
    %v899 = vpop.f32.mrb[0].mxu0
    %v900 = vadd.f32 0.0, %v899
    %v901 = vpop.f32.mrb[0].mxu0
    %902 = vmatprep.mubr.f32.mxu0 0.0
    %903 = vmatmul.mubr.f32.gmra.mrb[0].mxu0 %v83
    %v904 = vpop.f32.mrb[0].mxu0
    %v905 = vadd.f32 0.0, %v904
    %v906 = vpop.f32.mrb[0].mxu0
    %907 = vmatprep.mubr.f32.mxu0 0.0
    %908 = vmatmul.mubr.f32.gmra.mrb[0].mxu0 %v84
    %v909 = vpop.f32.mrb[0].mxu0
    %v910 = vadd.f32 0.0, %v909
    %v911 = vpop.f32.mrb[0].mxu0
    %912 = vmatprep.mubr.f32.mxu0 0.0
    %913 = vmatmul.mubr.f32.gmra.mrb[0].mxu0 %v85
    %v914 = vpop.f32.mrb[0].mxu0
    %v915 = vadd.f32 0.0, %v914
    %v916 = vpop.f32.mrb[0].mxu0
    %917 = vmatprep.mubr.f32.mxu0 0.0
    %918 = vmatmul.mubr.f32.gmra.mrb[0].mxu0 %v86
    %v919 = vpop.f32.mrb[0].mxu0
    %v920 = vadd.f32 0.0, %v919
    %v921 = vpop.f32.mrb[0].mxu0
    %922 = vmatprep.mubr.f32.mxu0 0.0
    %923 = vmatmul.mubr.f32.gmra.mrb[0].mxu0 %v87
    %v924 = vpop.f32.mrb[0].mxu0
    %v925 = vadd.f32 0.0, %v924
    %v926 = vpop.f32.mrb[0].mxu0
    %927 = vmatprep.mubr.f32.mxu0 0.0
    %928 = vmatmul.mubr.f32.gmra.mrb[0].mxu0 %v88
    %v929 = vpop.f32.mrb[0].mxu0
    %v930 = vadd.f32 0.0, %v929
    %v931 = vpop.f32.mrb[0].mxu0
    %932 = vmatprep.mubr.f32.mxu0 0.0
    %933 = vmatmul.mubr.f32.gmra.mrb[0].mxu0 %v89
    %v934 = vpop.f32.mrb[0].mxu0
    %v935 = vadd.f32 0.0, %v934
    %v936 = vpop.f32.mrb[0].mxu0
    %937 = vmatprep.mubr.f32.mxu0 0.0
    %938 = vmatmul.mubr.f32.gmra.mrb[0].mxu0 %v90
    %v939 = vpop.f32.mrb[0].mxu0
    %v940 = vadd.f32 0.0, %v939
    %v941 = vpop.f32.mrb[0].mxu0
    %942 = vdwg.mxu0
    %v944 = vlaneseq
    %v945 = vshrl.u32 %v944, 7
    %v946 = vsub.s32 0, %v945
    %v947 = vrot.slane %v780, %v946
    %949 = vmatprep.subr.mxu0 0.0
    %950 = vmatpush1.msra.mxu0 %v764
    %951 = vmatprep.subr.mxu0 0.0
    %952 = vmatpush1.msra.mxu0 %v765
    %953 = vmatprep.subr.mxu0 0.0
    %954 = vmatpush1.msra.mxu0 %v766
    %955 = vmatprep.subr.mxu0 0.0
    %956 = vmatpush1.msra.mxu0 %v767
    %957 = vmatprep.subr.mxu0 0.0
    %958 = vmatpush1.msra.mxu0 %v768
    %959 = vmatprep.subr.mxu0 0.0
    %960 = vmatpush1.msra.mxu0 %v769
    %961 = vmatprep.subr.mxu0 0.0
    %962 = vmatpush1.msra.mxu0 %v770
    %963 = vmatprep.subr.mxu0 0.0
    %964 = vmatpush1.msra.mxu0 %v771
    %965 = vmatprep.subr.mxu0 0.0
    %966 = vmatpush1.msra.mxu0 %v772
    %967 = vmatprep.subr.mxu0 0.0
    %968 = vmatpush1.msra.mxu0 %v773
    %969 = vmatprep.subr.mxu0 0.0
    %970 = vmatpush1.msra.mxu0 %v774
    %971 = vmatprep.subr.mxu0 0.0
    %972 = vmatpush1.msra.mxu0 %v775
    %973 = vmatprep.subr.mxu0 0.0
    %974 = vmatpush1.msra.mxu0 %v776
    %975 = vmatprep.subr.mxu0 0.0
    %976 = vmatpush1.msra.mxu0 %v777
    %977 = vmatprep.subr.mxu0 0.0
    %978 = vmatpush1.msra.mxu0 %v778
    %979 = vmatprep.subr.mxu0 0.0
    %980 = vmatpush1.msra.mxu0 %v779
    %981 = vmatprep.subr.mxu0 0.0
    %982 = vmatpush1.msra.mxu0 0.0
    %983 = vmatprep.subr.mxu0 0.0
    %984 = vmatpush1.msra.mxu0 0.0
    %985 = vmatprep.subr.mxu0 0.0
    %986 = vmatpush1.msra.mxu0 0.0
    %987 = vmatprep.subr.mxu0 0.0
    %988 = vmatpush1.msra.mxu0 0.0
    %989 = vmatprep.subr.mxu0 0.0
    %990 = vmatpush1.msra.mxu0 0.0
    %991 = vmatprep.subr.mxu0 0.0
    %992 = vmatpush1.msra.mxu0 0.0
    %993 = vmatprep.subr.mxu0 0.0
    %994 = vmatpush1.msra.mxu0 0.0
    %995 = vmatprep.subr.mxu0 0.0
    %996 = vmatpush1.msra.mxu0 0.0
    %997 = vmatprep.subr.mxu0 0.0
    %998 = vmatpush1.msra.mxu0 0.0
    %999 = vmatprep.subr.mxu0 0.0
    %1000 = vmatpush1.msra.mxu0 0.0
    %1001 = vmatprep.subr.mxu0 0.0
    %1002 = vmatpush1.msra.mxu0 0.0
    %1003 = vmatprep.subr.mxu0 0.0
    %1004 = vmatpush1.msra.mxu0 0.0
    %1005 = vmatprep.subr.mxu0 0.0
    %1006 = vmatpush1.msra.mxu0 0.0
    %1007 = vmatprep.subr.mxu0 0.0
    %1008 = vmatpush1.msra.mxu0 0.0
    %1009 = vmatprep.subr.mxu0 0.0
    %1010 = vmatpush1.msra.mxu0 0.0
    %1011 = vmatprep.subr.mxu0 0.0
    %1012 = vmatpush1.msra.mxu0 0.0
    %1013 = vmatprep.mubr.f32.mxu0 0.0
    %1014 = vmatmul.mubr.f32.gmra.mrb[0].mxu0 %v865
    %v1015 = vpop.f32.mrb[0].mxu0
    %v1016 = vadd.f32 %v947, %v1015
    %v1017 = vpop.f32.mrb[0].mxu0
    %1018 = vmatprep.mubr.f32.mxu0 0.0
    %1019 = vmatmul.mubr.f32.gmra.mrb[0].mxu0 %v870
    %v1020 = vpop.f32.mrb[0].mxu0
    %v1021 = vadd.f32 %v947, %v1020
    %v1022 = vpop.f32.mrb[0].mxu0
    %1023 = vmatprep.mubr.f32.mxu0 0.0
    %1024 = vmatmul.mubr.f32.gmra.mrb[0].mxu0 %v875
    %v1025 = vpop.f32.mrb[0].mxu0
    %v1026 = vadd.f32 %v947, %v1025
    %v1027 = vpop.f32.mrb[0].mxu0
    %1028 = vmatprep.mubr.f32.mxu0 0.0
    %1029 = vmatmul.mubr.f32.gmra.mrb[0].mxu0 %v880
    %v1030 = vpop.f32.mrb[0].mxu0
    %v1031 = vadd.f32 %v947, %v1030
    %v1032 = vpop.f32.mrb[0].mxu0
    %1033 = vmatprep.mubr.f32.mxu0 0.0
    %1034 = vmatmul.mubr.f32.gmra.mrb[0].mxu0 %v885
    %v1035 = vpop.f32.mrb[0].mxu0
    %v1036 = vadd.f32 %v947, %v1035
    %v1037 = vpop.f32.mrb[0].mxu0
    %1038 = vmatprep.mubr.f32.mxu0 0.0
    %1039 = vmatmul.mubr.f32.gmra.mrb[0].mxu0 %v890
    %v1040 = vpop.f32.mrb[0].mxu0
    %v1041 = vadd.f32 %v947, %v1040
    %v1042 = vpop.f32.mrb[0].mxu0
    %1043 = vmatprep.mubr.f32.mxu0 0.0
    %1044 = vmatmul.mubr.f32.gmra.mrb[0].mxu0 %v895
    %v1045 = vpop.f32.mrb[0].mxu0
    %v1046 = vadd.f32 %v947, %v1045
    %v1047 = vpop.f32.mrb[0].mxu0
    %1048 = vmatprep.mubr.f32.mxu0 0.0
    %1049 = vmatmul.mubr.f32.gmra.mrb[0].mxu0 %v900
    %v1050 = vpop.f32.mrb[0].mxu0
    %v1051 = vadd.f32 %v947, %v1050
    %v1052 = vpop.f32.mrb[0].mxu0
    %1053 = vmatprep.mubr.f32.mxu0 0.0
    %1054 = vmatmul.mubr.f32.gmra.mrb[0].mxu0 %v905
    %v1055 = vpop.f32.mrb[0].mxu0
    %v1056 = vadd.f32 %v947, %v1055
    %v1057 = vpop.f32.mrb[0].mxu0
    %1058 = vmatprep.mubr.f32.mxu0 0.0
    %1059 = vmatmul.mubr.f32.gmra.mrb[0].mxu0 %v910
    %v1060 = vpop.f32.mrb[0].mxu0
    %v1061 = vadd.f32 %v947, %v1060
    %v1062 = vpop.f32.mrb[0].mxu0
    %1063 = vmatprep.mubr.f32.mxu0 0.0
    %1064 = vmatmul.mubr.f32.gmra.mrb[0].mxu0 %v915
    %v1065 = vpop.f32.mrb[0].mxu0
    %v1066 = vadd.f32 %v947, %v1065
    %v1067 = vpop.f32.mrb[0].mxu0
    %1068 = vmatprep.mubr.f32.mxu0 0.0
    %1069 = vmatmul.mubr.f32.gmra.mrb[0].mxu0 %v920
    %v1070 = vpop.f32.mrb[0].mxu0
    %v1071 = vadd.f32 %v947, %v1070
    %v1072 = vpop.f32.mrb[0].mxu0
    %1073 = vmatprep.mubr.f32.mxu0 0.0
    %1074 = vmatmul.mubr.f32.gmra.mrb[0].mxu0 %v925
    %v1075 = vpop.f32.mrb[0].mxu0
    %v1076 = vadd.f32 %v947, %v1075
    %v1077 = vpop.f32.mrb[0].mxu0
    %1078 = vmatprep.mubr.f32.mxu0 0.0
    %1079 = vmatmul.mubr.f32.gmra.mrb[0].mxu0 %v930
    %v1080 = vpop.f32.mrb[0].mxu0
    %v1081 = vadd.f32 %v947, %v1080
    %v1082 = vpop.f32.mrb[0].mxu0
    %1083 = vmatprep.mubr.f32.mxu0 0.0
    %1084 = vmatmul.mubr.f32.gmra.mrb[0].mxu0 %v935
    %v1085 = vpop.f32.mrb[0].mxu0
    %v1086 = vadd.f32 %v947, %v1085
    %v1087 = vpop.f32.mrb[0].mxu0
    %1088 = vmatprep.mubr.f32.mxu0 0.0
    %1089 = vmatmul.mubr.f32.gmra.mrb[0].mxu0 %v940
    %v1090 = vpop.f32.mrb[0].mxu0
    %v1091 = vadd.f32 %v947, %v1090
    %v1092 = vpop.f32.mrb[0].mxu0
    %1093 = vdwg.mxu0
    %v1094 = vand.u32 2147483647, %v1016
    %v1095 = vand.u32 2147483647, %v1021
    %v1096 = vand.u32 2147483647, %v1026
    %v1097 = vand.u32 2147483647, %v1031
    %v1098 = vand.u32 2147483647, %v1036
    %v1099 = vand.u32 2147483647, %v1041
    %v1100 = vand.u32 2147483647, %v1046
    %v1101 = vand.u32 2147483647, %v1051
    %v1102 = vand.u32 2147483647, %v1056
    %v1103 = vand.u32 2147483647, %v1061
    %v1104 = vand.u32 2147483647, %v1066
    %v1105 = vand.u32 2147483647, %v1071
    %v1106 = vand.u32 2147483647, %v1076
    %v1107 = vand.u32 2147483647, %v1081
    %v1108 = vand.u32 2147483647, %v1086
    %v1109 = vand.u32 2147483647, %v1091
    %vm1110 = vcmp.lt.f32.partialorder %v1094, 0.001
    %vm1111 = vcmp.lt.f32.partialorder %v1095, 0.001
    %vm1112 = vcmp.lt.f32.partialorder %v1096, 0.001
    %vm1113 = vcmp.lt.f32.partialorder %v1097, 0.001
    %vm1114 = vcmp.lt.f32.partialorder %v1098, 0.001
    %vm1115 = vcmp.lt.f32.partialorder %v1099, 0.001
    %vm1116 = vcmp.lt.f32.partialorder %v1100, 0.001
    %vm1117 = vcmp.lt.f32.partialorder %v1101, 0.001
    %vm1118 = vcmp.lt.f32.partialorder %v1102, 0.001
    %vm1119 = vcmp.lt.f32.partialorder %v1103, 0.001
    %vm1120 = vcmp.lt.f32.partialorder %v1104, 0.001
    %vm1121 = vcmp.lt.f32.partialorder %v1105, 0.001
    %vm1122 = vcmp.lt.f32.partialorder %v1106, 0.001
    %vm1123 = vcmp.lt.f32.partialorder %v1107, 0.001
    %vm1124 = vcmp.lt.f32.partialorder %v1108, 0.001
    %vm1125 = vcmp.lt.f32.partialorder %v1109, 0.001
    %v1126 = vmul.f32 %v1016, 0.5
    %v1127 = vmul.f32 %v1021, 0.5
    %v1128 = vmul.f32 %v1026, 0.5
    %v1129 = vmul.f32 %v1031, 0.5
    %v1130 = vmul.f32 %v1036, 0.5
    %v1131 = vmul.f32 %v1041, 0.5
    %v1132 = vmul.f32 %v1046, 0.5
    %v1133 = vmul.f32 %v1051, 0.5
    %v1134 = vmul.f32 %v1056, 0.5
    %v1135 = vmul.f32 %v1061, 0.5
    %v1136 = vmul.f32 %v1066, 0.5
    %v1137 = vmul.f32 %v1071, 0.5
    %v1138 = vmul.f32 %v1076, 0.5
    %v1139 = vmul.f32 %v1081, 0.5
    %v1140 = vmul.f32 %v1086, 0.5
    %v1141 = vmul.f32 %v1091, 0.5
    %v1142 = vmul.f32 %v1126, %v1016
    %v1143 = vmul.f32 %v1127, %v1021
    %v1144 = vmul.f32 %v1128, %v1026
    %v1145 = vmul.f32 %v1129, %v1031
    %v1146 = vmul.f32 %v1130, %v1036
    %v1147 = vmul.f32 %v1131, %v1041
    %v1148 = vmul.f32 %v1132, %v1046
    %v1149 = vmul.f32 %v1133, %v1051
    %v1150 = vmul.f32 %v1134, %v1056
    %v1151 = vmul.f32 %v1135, %v1061
    %v1152 = vmul.f32 %v1136, %v1066
    %v1153 = vmul.f32 %v1137, %v1071
    %v1154 = vmul.f32 %v1138, %v1076
    %v1155 = vmul.f32 %v1139, %v1081
    %v1156 = vmul.f32 %v1140, %v1086
    %v1157 = vmul.f32 %v1141, %v1091
    %v1158 = vadd.f32 %v1016, %v1142
    %v1159 = vadd.f32 %v1021, %v1143
    %v1160 = vadd.f32 %v1026, %v1144
    %v1161 = vadd.f32 %v1031, %v1145
    %v1162 = vadd.f32 %v1036, %v1146
    %v1163 = vadd.f32 %v1041, %v1147
    %v1164 = vadd.f32 %v1046, %v1148
    %v1165 = vadd.f32 %v1051, %v1149
    %v1166 = vadd.f32 %v1056, %v1150
    %v1167 = vadd.f32 %v1061, %v1151
    %v1168 = vadd.f32 %v1066, %v1152
    %v1169 = vadd.f32 %v1071, %v1153
    %v1170 = vadd.f32 %v1076, %v1154
    %v1171 = vadd.f32 %v1081, %v1155
    %v1172 = vadd.f32 %v1086, %v1156
    %v1173 = vadd.f32 %v1091, %v1157
    %v1174 = vmul.f32 %v1016, 1.442695
    %v1175 = vpow.pop %v1174
    %v1176 = vmul.f32 %v1021, 1.442695
    %v1177 = vpow.pop %v1176
    %v1178 = vmul.f32 %v1026, 1.442695
    %v1179 = vpow.pop %v1178
    %v1180 = vmul.f32 %v1031, 1.442695
    %v1181 = vpow.pop %v1180
    %v1182 = vmul.f32 %v1036, 1.442695
    %v1183 = vpow.pop %v1182
    %v1184 = vmul.f32 %v1041, 1.442695
    %v1185 = vpow.pop %v1184
    %v1186 = vmul.f32 %v1046, 1.442695
    %v1187 = vpow.pop %v1186
    %v1188 = vmul.f32 %v1051, 1.442695
    %v1189 = vpow.pop %v1188
    %v1190 = vmul.f32 %v1056, 1.442695
    %v1191 = vpow.pop %v1190
    %v1192 = vmul.f32 %v1061, 1.442695
    %v1193 = vpow.pop %v1192
    %v1194 = vmul.f32 %v1066, 1.442695
    %v1195 = vpow.pop %v1194
    %v1196 = vmul.f32 %v1071, 1.442695
    %v1197 = vpow.pop %v1196
    %v1198 = vmul.f32 %v1076, 1.442695
    %v1199 = vpow.pop %v1198
    %v1200 = vmul.f32 %v1081, 1.442695
    %v1201 = vpow.pop %v1200
    %v1202 = vmul.f32 %v1086, 1.442695
    %v1203 = vpow.pop %v1202
    %v1204 = vmul.f32 %v1091, 1.442695
    %v1205 = vpow.pop %v1204
    %v1206 = vsub.f32 %v1175, 1.0
    %v1207 = vsub.f32 %v1177, 1.0
    %v1208 = vsub.f32 %v1179, 1.0
    %v1209 = vsub.f32 %v1181, 1.0
    %v1210 = vsub.f32 %v1183, 1.0
    %v1211 = vsub.f32 %v1185, 1.0
    %v1212 = vsub.f32 %v1187, 1.0
    %v1213 = vsub.f32 %v1189, 1.0
    %v1214 = vsub.f32 %v1191, 1.0
    %v1215 = vsub.f32 %v1193, 1.0
    %v1216 = vsub.f32 %v1195, 1.0
    %v1217 = vsub.f32 %v1197, 1.0
    %v1218 = vsub.f32 %v1199, 1.0
    %v1219 = vsub.f32 %v1201, 1.0
    %v1220 = vsub.f32 %v1203, 1.0
    %v1221 = vsub.f32 %v1205, 1.0
    %v1222 = vsel %vm1110, %v1158, %v1206
    %v1223 = vsel %vm1111, %v1159, %v1207
    %v1224 = vsel %vm1112, %v1160, %v1208
    %v1225 = vsel %vm1113, %v1161, %v1209
    %v1226 = vsel %vm1114, %v1162, %v1210
    %v1227 = vsel %vm1115, %v1163, %v1211
    %v1228 = vsel %vm1116, %v1164, %v1212
    %v1229 = vsel %vm1117, %v1165, %v1213
    %v1230 = vsel %vm1118, %v1166, %v1214
    %v1231 = vsel %vm1119, %v1167, %v1215
    %v1232 = vsel %vm1120, %v1168, %v1216
    %v1233 = vsel %vm1121, %v1169, %v1217
    %v1234 = vsel %vm1122, %v1170, %v1218
    %v1235 = vsel %vm1123, %v1171, %v1219
    %v1236 = vsel %vm1124, %v1172, %v1220
    %v1237 = vsel %vm1125, %v1173, %v1221
    %vm1238 = vcmp.gt.f32.partialorder %v1016, 0.0
    %vm1239 = vcmp.gt.f32.partialorder %v1021, 0.0
    %vm1240 = vcmp.gt.f32.partialorder %v1026, 0.0
    %vm1241 = vcmp.gt.f32.partialorder %v1031, 0.0
    %vm1242 = vcmp.gt.f32.partialorder %v1036, 0.0
    %vm1243 = vcmp.gt.f32.partialorder %v1041, 0.0
    %vm1244 = vcmp.gt.f32.partialorder %v1046, 0.0
    %vm1245 = vcmp.gt.f32.partialorder %v1051, 0.0
    %vm1246 = vcmp.gt.f32.partialorder %v1056, 0.0
    %vm1247 = vcmp.gt.f32.partialorder %v1061, 0.0
    %vm1248 = vcmp.gt.f32.partialorder %v1066, 0.0
    %vm1249 = vcmp.gt.f32.partialorder %v1071, 0.0
    %vm1250 = vcmp.gt.f32.partialorder %v1076, 0.0
    %vm1251 = vcmp.gt.f32.partialorder %v1081, 0.0
    %vm1252 = vcmp.gt.f32.partialorder %v1086, 0.0
    %vm1253 = vcmp.gt.f32.partialorder %v1091, 0.0
    %v1254 = vsel %vm1238, %v1016, %v1222
    %v1255 = vsel %vm1239, %v1021, %v1223
    %v1256 = vsel %vm1240, %v1026, %v1224
    %v1257 = vsel %vm1241, %v1031, %v1225
    %v1258 = vsel %vm1242, %v1036, %v1226
    %v1259 = vsel %vm1243, %v1041, %v1227
    %v1260 = vsel %vm1244, %v1046, %v1228
    %v1261 = vsel %vm1245, %v1051, %v1229
    %v1262 = vsel %vm1246, %v1056, %v1230
    %v1263 = vsel %vm1247, %v1061, %v1231
    %v1264 = vsel %vm1248, %v1066, %v1232
    %v1265 = vsel %vm1249, %v1071, %v1233
    %v1266 = vsel %vm1250, %v1076, %v1234
    %v1267 = vsel %vm1251, %v1081, %v1235
    %v1268 = vsel %vm1252, %v1086, %v1236
    %v1269 = vsel %vm1253, %v1091, %v1237
    %v1271 = vlaneseq
    %v1272 = vshrl.u32 %v1271, 7
    %v1273 = vsub.s32 0, %v1272
    %v1274 = vrot.slane %v797, %v1273
    %1276 = vmatprep.subr.mxu0 0.0
    %1277 = vmatpush1.msra.mxu0 %v781
    %1278 = vmatprep.subr.mxu0 0.0
    %1279 = vmatpush1.msra.mxu0 %v782
    %1280 = vmatprep.subr.mxu0 0.0
    %1281 = vmatpush1.msra.mxu0 %v783
    %1282 = vmatprep.subr.mxu0 0.0
    %1283 = vmatpush1.msra.mxu0 %v784
    %1284 = vmatprep.subr.mxu0 0.0
    %1285 = vmatpush1.msra.mxu0 %v785
    %1286 = vmatprep.subr.mxu0 0.0
    %1287 = vmatpush1.msra.mxu0 %v786
    %1288 = vmatprep.subr.mxu0 0.0
    %1289 = vmatpush1.msra.mxu0 %v787
    %1290 = vmatprep.subr.mxu0 0.0
    %1291 = vmatpush1.msra.mxu0 %v788
    %1292 = vmatprep.subr.mxu0 0.0
    %1293 = vmatpush1.msra.mxu0 %v789
    %1294 = vmatprep.subr.mxu0 0.0
    %1295 = vmatpush1.msra.mxu0 %v790
    %1296 = vmatprep.subr.mxu0 0.0
    %1297 = vmatpush1.msra.mxu0 %v791
    %1298 = vmatprep.subr.mxu0 0.0
    %1299 = vmatpush1.msra.mxu0 %v792
    %1300 = vmatprep.subr.mxu0 0.0
    %1301 = vmatpush1.msra.mxu0 %v793
    %1302 = vmatprep.subr.mxu0 0.0
    %1303 = vmatpush1.msra.mxu0 %v794
    %1304 = vmatprep.subr.mxu0 0.0
    %1305 = vmatpush1.msra.mxu0 %v795
    %1306 = vmatprep.subr.mxu0 0.0
    %1307 = vmatpush1.msra.mxu0 %v796
    %1308 = vmatprep.subr.mxu0 0.0
    %1309 = vmatpush1.msra.mxu0 0.0
    %1310 = vmatprep.subr.mxu0 0.0
    %1311 = vmatpush1.msra.mxu0 0.0
    %1312 = vmatprep.subr.mxu0 0.0
    %1313 = vmatpush1.msra.mxu0 0.0
    %1314 = vmatprep.subr.mxu0 0.0
    %1315 = vmatpush1.msra.mxu0 0.0
    %1316 = vmatprep.subr.mxu0 0.0
    %1317 = vmatpush1.msra.mxu0 0.0
    %1318 = vmatprep.subr.mxu0 0.0
    %1319 = vmatpush1.msra.mxu0 0.0
    %1320 = vmatprep.subr.mxu0 0.0
    %1321 = vmatpush1.msra.mxu0 0.0
    %1322 = vmatprep.subr.mxu0 0.0
    %1323 = vmatpush1.msra.mxu0 0.0
    %1324 = vmatprep.subr.mxu0 0.0
    %1325 = vmatpush1.msra.mxu0 0.0
    %1326 = vmatprep.subr.mxu0 0.0
    %1327 = vmatpush1.msra.mxu0 0.0
    %1328 = vmatprep.subr.mxu0 0.0
    %1329 = vmatpush1.msra.mxu0 0.0
    %1330 = vmatprep.subr.mxu0 0.0
    %1331 = vmatpush1.msra.mxu0 0.0
    %1332 = vmatprep.subr.mxu0 0.0
    %1333 = vmatpush1.msra.mxu0 0.0
    %1334 = vmatprep.subr.mxu0 0.0
    %1335 = vmatpush1.msra.mxu0 0.0
    %1336 = vmatprep.subr.mxu0 0.0
    %1337 = vmatpush1.msra.mxu0 0.0
    %1338 = vmatprep.subr.mxu0 0.0
    %1339 = vmatpush1.msra.mxu0 0.0
    %1340 = vmatprep.mubr.f32.mxu0 0.0
    %1341 = vmatmul.mubr.f32.gmra.mrb[0].mxu0 %v1254
    %v1342 = vpop.f32.mrb[0].mxu0
    %v1343 = vadd.f32 %v1274, %v1342
    %v1344 = vpop.f32.mrb[0].mxu0
    %1345 = vmatprep.mubr.f32.mxu0 0.0
    %1346 = vmatmul.mubr.f32.gmra.mrb[0].mxu0 %v1255
    %v1347 = vpop.f32.mrb[0].mxu0
    %v1348 = vadd.f32 %v1274, %v1347
    %v1349 = vpop.f32.mrb[0].mxu0
    %1350 = vmatprep.mubr.f32.mxu0 0.0
    %1351 = vmatmul.mubr.f32.gmra.mrb[0].mxu0 %v1256
    %v1352 = vpop.f32.mrb[0].mxu0
    %v1353 = vadd.f32 %v1274, %v1352
    %v1354 = vpop.f32.mrb[0].mxu0
    %1355 = vmatprep.mubr.f32.mxu0 0.0
    %1356 = vmatmul.mubr.f32.gmra.mrb[0].mxu0 %v1257
    %v1357 = vpop.f32.mrb[0].mxu0
    %v1358 = vadd.f32 %v1274, %v1357
    %v1359 = vpop.f32.mrb[0].mxu0
    %1360 = vmatprep.mubr.f32.mxu0 0.0
    %1361 = vmatmul.mubr.f32.gmra.mrb[0].mxu0 %v1258
    %v1362 = vpop.f32.mrb[0].mxu0
    %v1363 = vadd.f32 %v1274, %v1362
    %v1364 = vpop.f32.mrb[0].mxu0
    %1365 = vmatprep.mubr.f32.mxu0 0.0
    %1366 = vmatmul.mubr.f32.gmra.mrb[0].mxu0 %v1259
    %v1367 = vpop.f32.mrb[0].mxu0
    %v1368 = vadd.f32 %v1274, %v1367
    %v1369 = vpop.f32.mrb[0].mxu0
    %1370 = vmatprep.mubr.f32.mxu0 0.0
    %1371 = vmatmul.mubr.f32.gmra.mrb[0].mxu0 %v1260
    %v1372 = vpop.f32.mrb[0].mxu0
    %v1373 = vadd.f32 %v1274, %v1372
    %v1374 = vpop.f32.mrb[0].mxu0
    %1375 = vmatprep.mubr.f32.mxu0 0.0
    %1376 = vmatmul.mubr.f32.gmra.mrb[0].mxu0 %v1261
    %v1377 = vpop.f32.mrb[0].mxu0
    %v1378 = vadd.f32 %v1274, %v1377
    %v1379 = vpop.f32.mrb[0].mxu0
    %1380 = vmatprep.mubr.f32.mxu0 0.0
    %1381 = vmatmul.mubr.f32.gmra.mrb[0].mxu0 %v1262
    %v1382 = vpop.f32.mrb[0].mxu0
    %v1383 = vadd.f32 %v1274, %v1382
    %v1384 = vpop.f32.mrb[0].mxu0
    %1385 = vmatprep.mubr.f32.mxu0 0.0
    %1386 = vmatmul.mubr.f32.gmra.mrb[0].mxu0 %v1263
    %v1387 = vpop.f32.mrb[0].mxu0
    %v1388 = vadd.f32 %v1274, %v1387
    %v1389 = vpop.f32.mrb[0].mxu0
    %1390 = vmatprep.mubr.f32.mxu0 0.0
    %1391 = vmatmul.mubr.f32.gmra.mrb[0].mxu0 %v1264
    %v1392 = vpop.f32.mrb[0].mxu0
    %v1393 = vadd.f32 %v1274, %v1392
    %v1394 = vpop.f32.mrb[0].mxu0
    %1395 = vmatprep.mubr.f32.mxu0 0.0
    %1396 = vmatmul.mubr.f32.gmra.mrb[0].mxu0 %v1265
    %v1397 = vpop.f32.mrb[0].mxu0
    %v1398 = vadd.f32 %v1274, %v1397
    %v1399 = vpop.f32.mrb[0].mxu0
    %1400 = vmatprep.mubr.f32.mxu0 0.0
    %1401 = vmatmul.mubr.f32.gmra.mrb[0].mxu0 %v1266
    %v1402 = vpop.f32.mrb[0].mxu0
    %v1403 = vadd.f32 %v1274, %v1402
    %v1404 = vpop.f32.mrb[0].mxu0
    %1405 = vmatprep.mubr.f32.mxu0 0.0
    %1406 = vmatmul.mubr.f32.gmra.mrb[0].mxu0 %v1267
    %v1407 = vpop.f32.mrb[0].mxu0
    %v1408 = vadd.f32 %v1274, %v1407
    %v1409 = vpop.f32.mrb[0].mxu0
    %1410 = vmatprep.mubr.f32.mxu0 0.0
    %1411 = vmatmul.mubr.f32.gmra.mrb[0].mxu0 %v1268
    %v1412 = vpop.f32.mrb[0].mxu0
    %v1413 = vadd.f32 %v1274, %v1412
    %v1414 = vpop.f32.mrb[0].mxu0
    %1415 = vmatprep.mubr.f32.mxu0 0.0
    %1416 = vmatmul.mubr.f32.gmra.mrb[0].mxu0 %v1269
    %v1417 = vpop.f32.mrb[0].mxu0
    %v1418 = vadd.f32 %v1274, %v1417
    %v1419 = vpop.f32.mrb[0].mxu0
    %1420 = vdwg.mxu0
    %v1421 = vld [vmem:[%s2] sm:$0x3]
    %v1422 = vld [vmem:[%s11] sm:$0x1]
    %v1424 = vlaneseq
    %v1425 = vshrl.u32 %v1424, 7
    %v1426 = vsub.s32 0, %v1425
    %v1427 = vrot.slane %v1422, %v1426
    %v1429 = vmul.f32 %v1343, %v1427
    %v1430 = vmul.f32 %v1348, %v1427
    %v1431 = vmul.f32 %v1353, %v1427
    %v1432 = vmul.f32 %v1358, %v1427
    %v1433 = vmul.f32 %v1363, %v1427
    %v1434 = vmul.f32 %v1368, %v1427
    %v1435 = vmul.f32 %v1373, %v1427
    %v1436 = vmul.f32 %v1378, %v1427
    %v1437 = vmul.f32 %v1383, %v1427
    %v1438 = vmul.f32 %v1388, %v1427
    %v1439 = vmul.f32 %v1393, %v1427
    %v1440 = vmul.f32 %v1398, %v1427
    %v1441 = vmul.f32 %v1403, %v1427
    %v1442 = vmul.f32 %v1408, %v1427
    %v1443 = vmul.f32 %v1413, %v1427
    %v1444 = vmul.f32 %v1418, %v1427
    %1445 = vadd.xlane.f32.xlu0 %v1429
    %v1446 = vpop.xlane.xlu0 %1445
    %1447 = vadd.xlane.f32.xlu0 %v1430
    %v1448 = vpop.xlane.xlu0 %1447
    %1449 = vadd.xlane.f32.xlu0 %v1431
    %v1450 = vpop.xlane.xlu0 %1449
    %1451 = vadd.xlane.f32.xlu0 %v1432
    %v1452 = vpop.xlane.xlu0 %1451
    %1453 = vadd.xlane.f32.xlu0 %v1433
    %v1454 = vpop.xlane.xlu0 %1453
    %1455 = vadd.xlane.f32.xlu0 %v1434
    %v1456 = vpop.xlane.xlu0 %1455
    %1457 = vadd.xlane.f32.xlu0 %v1435
    %v1458 = vpop.xlane.xlu0 %1457
    %1459 = vadd.xlane.f32.xlu0 %v1436
    %v1460 = vpop.xlane.xlu0 %1459
    %1461 = vadd.xlane.f32.xlu0 %v1437
    %v1462 = vpop.xlane.xlu0 %1461
    %1463 = vadd.xlane.f32.xlu0 %v1438
    %v1464 = vpop.xlane.xlu0 %1463
    %1465 = vadd.xlane.f32.xlu0 %v1439
    %v1466 = vpop.xlane.xlu0 %1465
    %1467 = vadd.xlane.f32.xlu0 %v1440
    %v1468 = vpop.xlane.xlu0 %1467
    %1469 = vadd.xlane.f32.xlu0 %v1441
    %v1470 = vpop.xlane.xlu0 %1469
    %1471 = vadd.xlane.f32.xlu0 %v1442
    %v1472 = vpop.xlane.xlu0 %1471
    %1473 = vadd.xlane.f32.xlu0 %v1443
    %v1474 = vpop.xlane.xlu0 %1473
    %1475 = vadd.xlane.f32.xlu0 %v1444
    %v1476 = vpop.xlane.xlu0 %1475
    %s1477 = sld [smem:[#allocation2]]
    %v1478 = vstv %s1477
    %v1479 = vadd.f32 %v1446, %v1478
    %v1480 = vadd.f32 %v1448, %v1478
    %v1481 = vadd.f32 %v1450, %v1478
    %v1482 = vadd.f32 %v1452, %v1478
    %v1483 = vadd.f32 %v1454, %v1478
    %v1484 = vadd.f32 %v1456, %v1478
    %v1485 = vadd.f32 %v1458, %v1478
    %v1486 = vadd.f32 %v1460, %v1478
    %v1487 = vadd.f32 %v1462, %v1478
    %v1488 = vadd.f32 %v1464, %v1478
    %v1489 = vadd.f32 %v1466, %v1478
    %v1490 = vadd.f32 %v1468, %v1478
    %v1491 = vadd.f32 %v1470, %v1478
    %v1492 = vadd.f32 %v1472, %v1478
    %v1493 = vadd.f32 %v1474, %v1478
    %v1494 = vadd.f32 %v1476, %v1478
    %v1495 = vxor.u32 %v1479, 2147483648
    %v1496 = vxor.u32 %v1480, 2147483648
    %v1497 = vxor.u32 %v1481, 2147483648
    %v1498 = vxor.u32 %v1482, 2147483648
    %v1499 = vxor.u32 %v1483, 2147483648
    %v1500 = vxor.u32 %v1484, 2147483648
    %v1501 = vxor.u32 %v1485, 2147483648
    %v1502 = vxor.u32 %v1486, 2147483648
    %v1503 = vxor.u32 %v1487, 2147483648
    %v1504 = vxor.u32 %v1488, 2147483648
    %v1505 = vxor.u32 %v1489, 2147483648
    %v1506 = vxor.u32 %v1490, 2147483648
    %v1507 = vxor.u32 %v1491, 2147483648
    %v1508 = vxor.u32 %v1492, 2147483648
    %v1509 = vxor.u32 %v1493, 2147483648
    %v1510 = vxor.u32 %v1494, 2147483648
    %v1511 = vmul.f32 %v1495, 1.442695
    %v1512 = vpow.pop %v1511
    %v1513 = vmul.f32 %v1496, 1.442695
    %v1514 = vpow.pop %v1513
    %v1515 = vmul.f32 %v1497, 1.442695
    %v1516 = vpow.pop %v1515
    %v1517 = vmul.f32 %v1498, 1.442695
    %v1518 = vpow.pop %v1517
    %v1519 = vmul.f32 %v1499, 1.442695
    %v1520 = vpow.pop %v1519
    %v1521 = vmul.f32 %v1500, 1.442695
    %v1522 = vpow.pop %v1521
    %v1523 = vmul.f32 %v1501, 1.442695
    %v1524 = vpow.pop %v1523
    %v1525 = vmul.f32 %v1502, 1.442695
    %v1526 = vpow.pop %v1525
    %v1527 = vmul.f32 %v1503, 1.442695
    %v1528 = vpow.pop %v1527
    %v1529 = vmul.f32 %v1504, 1.442695
    %v1530 = vpow.pop %v1529
    %v1531 = vmul.f32 %v1505, 1.442695
    %v1532 = vpow.pop %v1531
    %v1533 = vmul.f32 %v1506, 1.442695
    %v1534 = vpow.pop %v1533
    %v1535 = vmul.f32 %v1507, 1.442695
    %v1536 = vpow.pop %v1535
    %v1537 = vmul.f32 %v1508, 1.442695
    %v1538 = vpow.pop %v1537
    %v1539 = vmul.f32 %v1509, 1.442695
    %v1540 = vpow.pop %v1539
    %v1541 = vmul.f32 %v1510, 1.442695
    %v1542 = vpow.pop %v1541
    %v1543 = vadd.f32 %v1512, 1.0
    %v1544 = vadd.f32 %v1514, 1.0
    %v1545 = vadd.f32 %v1516, 1.0
    %v1546 = vadd.f32 %v1518, 1.0
    %v1547 = vadd.f32 %v1520, 1.0
    %v1548 = vadd.f32 %v1522, 1.0
    %v1549 = vadd.f32 %v1524, 1.0
    %v1550 = vadd.f32 %v1526, 1.0
    %v1551 = vadd.f32 %v1528, 1.0
    %v1552 = vadd.f32 %v1530, 1.0
    %v1553 = vadd.f32 %v1532, 1.0
    %v1554 = vadd.f32 %v1534, 1.0
    %v1555 = vadd.f32 %v1536, 1.0
    %v1556 = vadd.f32 %v1538, 1.0
    %v1557 = vadd.f32 %v1540, 1.0
    %v1558 = vadd.f32 %v1542, 1.0
    %v1559 = vrcp.pop %v1543
    %v1560 = vmul.f32 1.0, %v1559
    %v1561 = vrcp.pop %v1544
    %v1562 = vmul.f32 1.0, %v1561
    %v1563 = vrcp.pop %v1545
    %v1564 = vmul.f32 1.0, %v1563
    %v1565 = vrcp.pop %v1546
    %v1566 = vmul.f32 1.0, %v1565
    %v1567 = vrcp.pop %v1547
    %v1568 = vmul.f32 1.0, %v1567
    %v1569 = vrcp.pop %v1548
    %v1570 = vmul.f32 1.0, %v1569
    %v1571 = vrcp.pop %v1549
    %v1572 = vmul.f32 1.0, %v1571
    %v1573 = vrcp.pop %v1550
    %v1574 = vmul.f32 1.0, %v1573
    %v1575 = vrcp.pop %v1551
    %v1576 = vmul.f32 1.0, %v1575
    %v1577 = vrcp.pop %v1552
    %v1578 = vmul.f32 1.0, %v1577
    %v1579 = vrcp.pop %v1553
    %v1580 = vmul.f32 1.0, %v1579
    %v1581 = vrcp.pop %v1554
    %v1582 = vmul.f32 1.0, %v1581
    %v1583 = vrcp.pop %v1555
    %v1584 = vmul.f32 1.0, %v1583
    %v1585 = vrcp.pop %v1556
    %v1586 = vmul.f32 1.0, %v1585
    %v1587 = vrcp.pop %v1557
    %v1588 = vmul.f32 1.0, %v1587
    %v1589 = vrcp.pop %v1558
    %v1590 = vmul.f32 1.0, %v1589
    %v1591 = vmul.f32 %v1560, %v1343
    %v1592 = vmul.f32 %v1562, %v1348
    %v1593 = vmul.f32 %v1564, %v1353
    %v1594 = vmul.f32 %v1566, %v1358
    %v1595 = vmul.f32 %v1568, %v1363
    %v1596 = vmul.f32 %v1570, %v1368
    %v1597 = vmul.f32 %v1572, %v1373
    %v1598 = vmul.f32 %v1574, %v1378
    %v1599 = vmul.f32 %v1576, %v1383
    %v1600 = vmul.f32 %v1578, %v1388
    %v1601 = vmul.f32 %v1580, %v1393
    %v1602 = vmul.f32 %v1582, %v1398
    %v1603 = vmul.f32 %v1584, %v1403
    %v1604 = vmul.f32 %v1586, %v1408
    %v1605 = vmul.f32 %v1588, %v1413
    %v1606 = vmul.f32 %v1590, %v1418
    %1607 = vmatprep.subr.mxu0 0.0
    %1608 = vmatpush1.msra.mxu0 %v1591
    %1609 = vmatprep.subr.mxu0 0.0
    %1610 = vmatpush1.msra.mxu0 %v1592
    %1611 = vmatprep.subr.mxu0 0.0
    %1612 = vmatpush1.msra.mxu0 %v1593
    %1613 = vmatprep.subr.mxu0 0.0
    %1614 = vmatpush1.msra.mxu0 %v1594
    %1615 = vmatprep.subr.mxu0 0.0
    %1616 = vmatpush1.msra.mxu0 %v1595
    %1617 = vmatprep.subr.mxu0 0.0
    %1618 = vmatpush1.msra.mxu0 %v1596
    %1619 = vmatprep.subr.mxu0 0.0
    %1620 = vmatpush1.msra.mxu0 %v1597
    %1621 = vmatprep.subr.mxu0 0.0
    %1622 = vmatpush1.msra.mxu0 %v1598
    %1623 = vmatprep.subr.mxu0 0.0
    %1624 = vmatpush1.msra.mxu0 %v1599
    %1625 = vmatprep.subr.mxu0 0.0
    %1626 = vmatpush1.msra.mxu0 %v1600
    %1627 = vmatprep.subr.mxu0 0.0
    %1628 = vmatpush1.msra.mxu0 %v1601
    %1629 = vmatprep.subr.mxu0 0.0
    %1630 = vmatpush1.msra.mxu0 %v1602
    %1631 = vmatprep.subr.mxu0 0.0
    %1632 = vmatpush1.msra.mxu0 %v1603
    %1633 = vmatprep.subr.mxu0 0.0
    %1634 = vmatpush1.msra.mxu0 %v1604
    %1635 = vmatprep.subr.mxu0 0.0
    %1636 = vmatpush1.msra.mxu0 %v1605
    %1637 = vmatprep.subr.mxu0 0.0
    %1638 = vmatpush1.msra.mxu0 %v1606
    %1639 = vmatprep.subr.mxu0 0.0
    %1640 = vmatpush1.msra.mxu0 0.0
    %1641 = vmatprep.subr.mxu0 0.0
    %1642 = vmatpush1.msra.mxu0 0.0
    %1643 = vmatprep.subr.mxu0 0.0
    %1644 = vmatpush1.msra.mxu0 0.0
    %1645 = vmatprep.subr.mxu0 0.0
    %1646 = vmatpush1.msra.mxu0 0.0
    %1647 = vmatprep.subr.mxu0 0.0
    %1648 = vmatpush1.msra.mxu0 0.0
    %1649 = vmatprep.subr.mxu0 0.0
    %1650 = vmatpush1.msra.mxu0 0.0
    %1651 = vmatprep.subr.mxu0 0.0
    %1652 = vmatpush1.msra.mxu0 0.0
    %1653 = vmatprep.subr.mxu0 0.0
    %1654 = vmatpush1.msra.mxu0 0.0
    %1655 = vmatprep.subr.mxu0 0.0
    %1656 = vmatpush1.msra.mxu0 0.0
    %1657 = vmatprep.subr.mxu0 0.0
    %1658 = vmatpush1.msra.mxu0 0.0
    %1659 = vmatprep.subr.mxu0 0.0
    %1660 = vmatpush1.msra.mxu0 0.0
    %1661 = vmatprep.subr.mxu0 0.0
    %1662 = vmatpush1.msra.mxu0 0.0
    %1663 = vmatprep.subr.mxu0 0.0
    %1664 = vmatpush1.msra.mxu0 0.0
    %1665 = vmatprep.subr.mxu0 0.0
    %1666 = vmatpush1.msra.mxu0 0.0
    %1667 = vmatprep.subr.mxu0 0.0
    %1668 = vmatpush1.msra.mxu0 0.0
    %1669 = vmatprep.subr.mxu0 0.0
    %1670 = vmatpush1.msra.mxu0 0.0
    %1671 = vmatprep.mubr.f32.mxu0 0.0
    %1672 = vmatmul.mubr.f32.gmra.mrb[0].mxu0 %v1421
    %v1673 = vpop.f32.mrb[0].mxu0
    %v1674 = vadd.f32 0.0, %v1673
    %v1675 = vpop.f32.mrb[0].mxu0
    %1676 = vdwg.mxu0
    %v1677 = vsub.f32 %v1421, 1.0
    %v1678 = vmul.f32 %v1677, 1e+30
    %v1679 = vlaneseq
    %v1680 = vshrl.u32 %v1679, 7
    %v1681 = vsub.s32 0, %v1680
    %v1682 = vrot.slane %v1678, %v1681
    %1684 = vbcast.lane.b32.xlu0 %v1682, 256
    %v1685 = vpop.permute.xlu0 %1684
    %s1687 = sor.u32 256, 8
    %1688 = vbcast.lane.b32.xlu0 %v1682, %s1687
    %v1689 = vpop.permute.xlu0 %1688
    %s1691 = sor.u32 256, 16
    %1692 = vbcast.lane.b32.xlu0 %v1682, %s1691
    %v1693 = vpop.permute.xlu0 %1692
    %s1695 = sor.u32 256, 24
    %1696 = vbcast.lane.b32.xlu0 %v1682, %s1695
    %v1697 = vpop.permute.xlu0 %1696
    %s1699 = sor.u32 256, 32
    %1700 = vbcast.lane.b32.xlu0 %v1682, %s1699
    %v1701 = vpop.permute.xlu0 %1700
    %s1703 = sor.u32 256, 40
    %1704 = vbcast.lane.b32.xlu0 %v1682, %s1703
    %v1705 = vpop.permute.xlu0 %1704
    %s1707 = sor.u32 256, 48
    %1708 = vbcast.lane.b32.xlu0 %v1682, %s1707
    %v1709 = vpop.permute.xlu0 %1708
    %s1711 = sor.u32 256, 56
    %1712 = vbcast.lane.b32.xlu0 %v1682, %s1711
    %v1713 = vpop.permute.xlu0 %1712
    %s1715 = sor.u32 256, 64
    %1716 = vbcast.lane.b32.xlu0 %v1682, %s1715
    %v1717 = vpop.permute.xlu0 %1716
    %s1719 = sor.u32 256, 72
    %1720 = vbcast.lane.b32.xlu0 %v1682, %s1719
    %v1721 = vpop.permute.xlu0 %1720
    %s1723 = sor.u32 256, 80
    %1724 = vbcast.lane.b32.xlu0 %v1682, %s1723
    %v1725 = vpop.permute.xlu0 %1724
    %s1727 = sor.u32 256, 88
    %1728 = vbcast.lane.b32.xlu0 %v1682, %s1727
    %v1729 = vpop.permute.xlu0 %1728
    %s1731 = sor.u32 256, 96
    %1732 = vbcast.lane.b32.xlu0 %v1682, %s1731
    %v1733 = vpop.permute.xlu0 %1732
    %s1735 = sor.u32 256, 104
    %1736 = vbcast.lane.b32.xlu0 %v1682, %s1735
    %v1737 = vpop.permute.xlu0 %1736
    %s1739 = sor.u32 256, 112
    %1740 = vbcast.lane.b32.xlu0 %v1682, %s1739
    %v1741 = vpop.permute.xlu0 %1740
    %s1743 = sor.u32 256, 120
    %1744 = vbcast.lane.b32.xlu0 %v1682, %s1743
    %v1745 = vpop.permute.xlu0 %1744
    %v1746 = vlaneseq
    %v1747 = vshrl.u32 %v1746, 7
    %v1748 = vsub.s32 1, %v1747
    %v1749 = vrot.slane %v1678, %v1748
    %1751 = vbcast.lane.b32.xlu0 %v1749, 256
    %v1752 = vpop.permute.xlu0 %1751
    %s1754 = sor.u32 256, 8
    %1755 = vbcast.lane.b32.xlu0 %v1749, %s1754
    %v1756 = vpop.permute.xlu0 %1755
    %s1758 = sor.u32 256, 16
    %1759 = vbcast.lane.b32.xlu0 %v1749, %s1758
    %v1760 = vpop.permute.xlu0 %1759
    %s1762 = sor.u32 256, 24
    %1763 = vbcast.lane.b32.xlu0 %v1749, %s1762
    %v1764 = vpop.permute.xlu0 %1763
    %s1766 = sor.u32 256, 32
    %1767 = vbcast.lane.b32.xlu0 %v1749, %s1766
    %v1768 = vpop.permute.xlu0 %1767
    %s1770 = sor.u32 256, 40
    %1771 = vbcast.lane.b32.xlu0 %v1749, %s1770
    %v1772 = vpop.permute.xlu0 %1771
    %s1774 = sor.u32 256, 48
    %1775 = vbcast.lane.b32.xlu0 %v1749, %s1774
    %v1776 = vpop.permute.xlu0 %1775
    %s1778 = sor.u32 256, 56
    %1779 = vbcast.lane.b32.xlu0 %v1749, %s1778
    %v1780 = vpop.permute.xlu0 %1779
    %s1782 = sor.u32 256, 64
    %1783 = vbcast.lane.b32.xlu0 %v1749, %s1782
    %v1784 = vpop.permute.xlu0 %1783
    %s1786 = sor.u32 256, 72
    %1787 = vbcast.lane.b32.xlu0 %v1749, %s1786
    %v1788 = vpop.permute.xlu0 %1787
    %s1790 = sor.u32 256, 80
    %1791 = vbcast.lane.b32.xlu0 %v1749, %s1790
    %v1792 = vpop.permute.xlu0 %1791
    %s1794 = sor.u32 256, 88
    %1795 = vbcast.lane.b32.xlu0 %v1749, %s1794
    %v1796 = vpop.permute.xlu0 %1795
    %s1798 = sor.u32 256, 96
    %1799 = vbcast.lane.b32.xlu0 %v1749, %s1798
    %v1800 = vpop.permute.xlu0 %1799
    %s1802 = sor.u32 256, 104
    %1803 = vbcast.lane.b32.xlu0 %v1749, %s1802
    %v1804 = vpop.permute.xlu0 %1803
    %s1806 = sor.u32 256, 112
    %1807 = vbcast.lane.b32.xlu0 %v1749, %s1806
    %v1808 = vpop.permute.xlu0 %1807
    %s1810 = sor.u32 256, 120
    %1811 = vbcast.lane.b32.xlu0 %v1749, %s1810
    %v1812 = vpop.permute.xlu0 %1811
    %v1813 = vadd.f32 %v1343, %v1685
    %v1814 = vadd.f32 %v1348, %v1689
    %v1815 = vadd.f32 %v1353, %v1693
    %v1816 = vadd.f32 %v1358, %v1697
    %v1817 = vadd.f32 %v1363, %v1701
    %v1818 = vadd.f32 %v1368, %v1705
    %v1819 = vadd.f32 %v1373, %v1709
    %v1820 = vadd.f32 %v1378, %v1713
    %v1821 = vadd.f32 %v1383, %v1717
    %v1822 = vadd.f32 %v1388, %v1721
    %v1823 = vadd.f32 %v1393, %v1725
    %v1824 = vadd.f32 %v1398, %v1729
    %v1825 = vadd.f32 %v1403, %v1733
    %v1826 = vadd.f32 %v1408, %v1737
    %v1827 = vadd.f32 %v1413, %v1741
    %v1828 = vadd.f32 %v1418, %v1745
    %v1829 = vadd.f32 %v1343, %v1752
    %v1830 = vadd.f32 %v1348, %v1756
    %v1831 = vadd.f32 %v1353, %v1760
    %v1832 = vadd.f32 %v1358, %v1764
    %v1833 = vadd.f32 %v1363, %v1768
    %v1834 = vadd.f32 %v1368, %v1772
    %v1835 = vadd.f32 %v1373, %v1776
    %v1836 = vadd.f32 %v1378, %v1780
    %v1837 = vadd.f32 %v1383, %v1784
    %v1838 = vadd.f32 %v1388, %v1788
    %v1839 = vadd.f32 %v1393, %v1792
    %v1840 = vadd.f32 %v1398, %v1796
    %v1841 = vadd.f32 %v1403, %v1800
    %v1842 = vadd.f32 %v1408, %v1804
    %v1843 = vadd.f32 %v1413, %v1808
    %v1844 = vadd.f32 %v1418, %v1812
    %v1845 = vmax.f32 %v1813, %v1815
    %v1846 = vmax.f32 %v1814, %v1816
    %v1847 = vmax.f32 %v1845, %v1817
    %v1848 = vmax.f32 %v1846, %v1818
    %v1849 = vmax.f32 %v1847, %v1819
    %v1850 = vmax.f32 %v1848, %v1820
    %v1851 = vmax.f32 %v1849, %v1821
    %v1852 = vmax.f32 %v1850, %v1822
    %v1853 = vmax.f32 %v1851, %v1823
    %v1854 = vmax.f32 %v1852, %v1824
    %v1855 = vmax.f32 %v1853, %v1825
    %v1856 = vmax.f32 %v1854, %v1826
    %v1857 = vmax.f32 %v1855, %v1827
    %v1858 = vmax.f32 %v1856, %v1828
    %v1859 = vmax.f32 %v1857, %v1858
    %v1860 = vrot.slane %v1859, 4
    %v1861 = vmax.f32 %v1859, %v1860
    %v1862 = vrot.slane %v1861, 2
    %v1863 = vmax.f32 %v1861, %v1862
    %v1864 = vrot.slane %v1863, 1
    %v1865 = vmax.f32 %v1863, %v1864
    %v1866 = vmax.f32 %v1829, %v1831
    %v1867 = vmax.f32 %v1830, %v1832
    %v1868 = vmax.f32 %v1866, %v1833
    %v1869 = vmax.f32 %v1867, %v1834
    %v1870 = vmax.f32 %v1868, %v1835
    %v1871 = vmax.f32 %v1869, %v1836
    %v1872 = vmax.f32 %v1870, %v1837
    %v1873 = vmax.f32 %v1871, %v1838
    %v1874 = vmax.f32 %v1872, %v1839
    %v1875 = vmax.f32 %v1873, %v1840
    %v1876 = vmax.f32 %v1874, %v1841
    %v1877 = vmax.f32 %v1875, %v1842
    %v1878 = vmax.f32 %v1876, %v1843
    %v1879 = vmax.f32 %v1877, %v1844
    %v1880 = vmax.f32 %v1878, %v1879
    %v1881 = vrot.slane %v1880, 4
    %v1882 = vmax.f32 %v1880, %v1881
    %v1883 = vrot.slane %v1882, 2
    %v1884 = vmax.f32 %v1882, %v1883
    %v1885 = vrot.slane %v1884, 1
    %v1886 = vmax.f32 %v1884, %v1885
    %v1887 = vld [vmem:[%s13] sm:$0xff]
    %v1888 = vld [vmem:[%s13 + $0x8] sm:$0xff]
    %v1889 = vld [vmem:[%s13 + $0x10] sm:$0xff]
    %v1890 = vld [vmem:[%s13 + $0x18] sm:$0xff]
    %v1891 = vld [vmem:[%s13 + $0x20] sm:$0xff]
    %v1892 = vld [vmem:[%s13 + $0x28] sm:$0xff]
    %v1893 = vld [vmem:[%s13 + $0x30] sm:$0xff]
    %v1894 = vld [vmem:[%s13 + $0x38] sm:$0xff]
    %v1895 = vld [vmem:[%s13 + $0x40] sm:$0xff]
    %v1896 = vld [vmem:[%s13 + $0x48] sm:$0xff]
    %v1897 = vld [vmem:[%s13 + $0x50] sm:$0xff]
    %v1898 = vld [vmem:[%s13 + $0x58] sm:$0xff]
    %v1899 = vld [vmem:[%s13 + $0x60] sm:$0xff]
    %v1900 = vld [vmem:[%s13 + $0x68] sm:$0xff]
    %v1901 = vld [vmem:[%s13 + $0x70] sm:$0xff]
    %v1902 = vld [vmem:[%s13 + $0x78] sm:$0xff]
    %v1903 = vld [vmem:[%s14] sm:$0xff]
    %v1904 = vld [vmem:[%s14 + $0x8] sm:$0xff]
    %v1905 = vld [vmem:[%s14 + $0x10] sm:$0xff]
    %v1906 = vld [vmem:[%s14 + $0x18] sm:$0xff]
    %v1907 = vld [vmem:[%s14 + $0x20] sm:$0xff]
    %v1908 = vld [vmem:[%s14 + $0x28] sm:$0xff]
    %v1909 = vld [vmem:[%s14 + $0x30] sm:$0xff]
    %v1910 = vld [vmem:[%s14 + $0x38] sm:$0xff]
    %v1911 = vld [vmem:[%s14 + $0x40] sm:$0xff]
    %v1912 = vld [vmem:[%s14 + $0x48] sm:$0xff]
    %v1913 = vld [vmem:[%s14 + $0x50] sm:$0xff]
    %v1914 = vld [vmem:[%s14 + $0x58] sm:$0xff]
    %v1915 = vld [vmem:[%s14 + $0x60] sm:$0xff]
    %v1916 = vld [vmem:[%s14 + $0x68] sm:$0xff]
    %v1917 = vld [vmem:[%s14 + $0x70] sm:$0xff]
    %v1918 = vld [vmem:[%s14 + $0x78] sm:$0xff]
    %vm1921 = vcmask 1041409
    %v1922 = vsel %vm1921, %v1886, %v1865
    %1924 = vmatprep.subr.mxu0 0.0
    %1925 = vmatpush1.msra.mxu0 %v1903
    %1926 = vmatprep.subr.mxu0 0.0
    %1927 = vmatpush1.msra.mxu0 %v1904
    %1928 = vmatprep.subr.mxu0 0.0
    %1929 = vmatpush1.msra.mxu0 %v1905
    %1930 = vmatprep.subr.mxu0 0.0
    %1931 = vmatpush1.msra.mxu0 %v1906
    %1932 = vmatprep.subr.mxu0 0.0
    %1933 = vmatpush1.msra.mxu0 %v1907
    %1934 = vmatprep.subr.mxu0 0.0
    %1935 = vmatpush1.msra.mxu0 %v1908
    %1936 = vmatprep.subr.mxu0 0.0
    %1937 = vmatpush1.msra.mxu0 %v1909
    %1938 = vmatprep.subr.mxu0 0.0
    %1939 = vmatpush1.msra.mxu0 %v1910
    %1940 = vmatprep.subr.mxu0 0.0
    %1941 = vmatpush1.msra.mxu0 %v1911
    %1942 = vmatprep.subr.mxu0 0.0
    %1943 = vmatpush1.msra.mxu0 %v1912
    %1944 = vmatprep.subr.mxu0 0.0
    %1945 = vmatpush1.msra.mxu0 %v1913
    %1946 = vmatprep.subr.mxu0 0.0
    %1947 = vmatpush1.msra.mxu0 %v1914
    %1948 = vmatprep.subr.mxu0 0.0
    %1949 = vmatpush1.msra.mxu0 %v1915
    %1950 = vmatprep.subr.mxu0 0.0
    %1951 = vmatpush1.msra.mxu0 %v1916
    %1952 = vmatprep.subr.mxu0 0.0
    %1953 = vmatpush1.msra.mxu0 %v1917
    %1954 = vmatprep.subr.mxu0 0.0
    %1955 = vmatpush1.msra.mxu0 %v1918
    %1956 = vmatprep.subr.mxu0 0.0
    %1957 = vmatpush1.msra.mxu0 0.0
    %1958 = vmatprep.subr.mxu0 0.0
    %1959 = vmatpush1.msra.mxu0 0.0
    %1960 = vmatprep.subr.mxu0 0.0
    %1961 = vmatpush1.msra.mxu0 0.0
    %1962 = vmatprep.subr.mxu0 0.0
    %1963 = vmatpush1.msra.mxu0 0.0
    %1964 = vmatprep.subr.mxu0 0.0
    %1965 = vmatpush1.msra.mxu0 0.0
    %1966 = vmatprep.subr.mxu0 0.0
    %1967 = vmatpush1.msra.mxu0 0.0
    %1968 = vmatprep.subr.mxu0 0.0
    %1969 = vmatpush1.msra.mxu0 0.0
    %1970 = vmatprep.subr.mxu0 0.0
    %1971 = vmatpush1.msra.mxu0 0.0
    %1972 = vmatprep.subr.mxu0 0.0
    %1973 = vmatpush1.msra.mxu0 0.0
    %1974 = vmatprep.subr.mxu0 0.0
    %1975 = vmatpush1.msra.mxu0 0.0
    %1976 = vmatprep.subr.mxu0 0.0
    %1977 = vmatpush1.msra.mxu0 0.0
    %1978 = vmatprep.subr.mxu0 0.0
    %1979 = vmatpush1.msra.mxu0 0.0
    %1980 = vmatprep.subr.mxu0 0.0
    %1981 = vmatpush1.msra.mxu0 0.0
    %1982 = vmatprep.subr.mxu0 0.0
    %1983 = vmatpush1.msra.mxu0 0.0
    %1984 = vmatprep.subr.mxu0 0.0
    %1985 = vmatpush1.msra.mxu0 0.0
    %1986 = vmatprep.subr.mxu0 0.0
    %1987 = vmatpush1.msra.mxu0 0.0
    %1988 = vmatprep.mubr.f32.mxu0 0.0
    %1989 = vmatmul.mubr.f32.gmra.mrb[0].mxu0 %v1922
    %v1990 = vpop.f32.mrb[0].mxu0
    %v1991 = vadd.f32 0.0, %v1990
    %v1992 = vpop.f32.mrb[0].mxu0
    %1993 = vdwg.mxu0
    %1994 = vmatprep.subr.mxu0 0.0
    %1995 = vmatpush1.msra.mxu0 %v1887
    %1996 = vmatprep.subr.mxu0 0.0
    %1997 = vmatpush1.msra.mxu0 %v1888
    %1998 = vmatprep.subr.mxu0 0.0
    %1999 = vmatpush1.msra.mxu0 %v1889
    %2000 = vmatprep.subr.mxu0 0.0
    %2001 = vmatpush1.msra.mxu0 %v1890
    %2002 = vmatprep.subr.mxu0 0.0
    %2003 = vmatpush1.msra.mxu0 %v1891
    %2004 = vmatprep.subr.mxu0 0.0
    %2005 = vmatpush1.msra.mxu0 %v1892
    %2006 = vmatprep.subr.mxu0 0.0
    %2007 = vmatpush1.msra.mxu0 %v1893
    %2008 = vmatprep.subr.mxu0 0.0
    %2009 = vmatpush1.msra.mxu0 %v1894
    %2010 = vmatprep.subr.mxu0 0.0
    %2011 = vmatpush1.msra.mxu0 %v1895
    %2012 = vmatprep.subr.mxu0 0.0
    %2013 = vmatpush1.msra.mxu0 %v1896
    %2014 = vmatprep.subr.mxu0 0.0
    %2015 = vmatpush1.msra.mxu0 %v1897
    %2016 = vmatprep.subr.mxu0 0.0
    %2017 = vmatpush1.msra.mxu0 %v1898
    %2018 = vmatprep.subr.mxu0 0.0
    %2019 = vmatpush1.msra.mxu0 %v1899
    %2020 = vmatprep.subr.mxu0 0.0
    %2021 = vmatpush1.msra.mxu0 %v1900
    %2022 = vmatprep.subr.mxu0 0.0
    %2023 = vmatpush1.msra.mxu0 %v1901
    %2024 = vmatprep.subr.mxu0 0.0
    %2025 = vmatpush1.msra.mxu0 %v1902
    %2026 = vmatprep.subr.mxu0 0.0
    %2027 = vmatpush1.msra.mxu0 0.0
    %2028 = vmatprep.subr.mxu0 0.0
    %2029 = vmatpush1.msra.mxu0 0.0
    %2030 = vmatprep.subr.mxu0 0.0
    %2031 = vmatpush1.msra.mxu0 0.0
    %2032 = vmatprep.subr.mxu0 0.0
    %2033 = vmatpush1.msra.mxu0 0.0
    %2034 = vmatprep.subr.mxu0 0.0
    %2035 = vmatpush1.msra.mxu0 0.0
    %2036 = vmatprep.subr.mxu0 0.0
    %2037 = vmatpush1.msra.mxu0 0.0
    %2038 = vmatprep.subr.mxu0 0.0
    %2039 = vmatpush1.msra.mxu0 0.0
    %2040 = vmatprep.subr.mxu0 0.0
    %2041 = vmatpush1.msra.mxu0 0.0
    %2042 = vmatprep.subr.mxu0 0.0
    %2043 = vmatpush1.msra.mxu0 0.0
    %2044 = vmatprep.subr.mxu0 0.0
    %2045 = vmatpush1.msra.mxu0 0.0
    %2046 = vmatprep.subr.mxu0 0.0
    %2047 = vmatpush1.msra.mxu0 0.0
    %2048 = vmatprep.subr.mxu0 0.0
    %2049 = vmatpush1.msra.mxu0 0.0
    %2050 = vmatprep.subr.mxu0 0.0
    %2051 = vmatpush1.msra.mxu0 0.0
    %2052 = vmatprep.subr.mxu0 0.0
    %2053 = vmatpush1.msra.mxu0 0.0
    %2054 = vmatprep.subr.mxu0 0.0
    %2055 = vmatpush1.msra.mxu0 0.0
    %2056 = vmatprep.subr.mxu0 0.0
    %2057 = vmatpush1.msra.mxu0 0.0
    %2058 = vmatprep.mubr.f32.mxu0 0.0
    %2059 = vmatmul.mubr.f32.gmra.mrb[0].mxu0 %v1674
    %v2060 = vpop.f32.mrb[0].mxu0
    %v2061 = vadd.f32 %v1991, %v2060
    %v2062 = vpop.f32.mrb[0].mxu0
    %2063 = vdwg.mxu0
    %v2064 = vld [vmem:[%s15] sm:$0x1]
    %v2066 = vlaneseq
    %v2067 = vshrl.u32 %v2066, 7
    %v2068 = vsub.s32 0, %v2067
    %v2069 = vrot.slane %v2064, %v2068
    %v2071 = vadd.f32 %v2061, %v2069
    %v2072 = vand.u32 2147483647, %v2071
    %vm2073 = vcmp.lt.f32.partialorder %v2072, 0.001
    %v2074 = vmul.f32 %v2071, 0.5
    %v2075 = vmul.f32 %v2074, %v2071
    %v2076 = vadd.f32 %v2071, %v2075
    %v2077 = vmul.f32 %v2071, 1.442695
    %v2078 = vpow.pop %v2077
    %v2079 = vsub.f32 %v2078, 1.0
    %v2080 = vsel %vm2073, %v2076, %v2079
    %vm2081 = vcmp.gt.f32.partialorder %v2071, 0.0
    %v2082 = vsel %vm2081, %v2071, %v2080
    %v2083 = vld [vmem:[%s16] sm:$0xff]
    %v2084 = vld [vmem:[%s16 + $0x8] sm:$0xff]
    %v2085 = vld [vmem:[%s16 + $0x10] sm:$0xff]
    %v2086 = vld [vmem:[%s16 + $0x18] sm:$0xff]
    %v2087 = vld [vmem:[%s16 + $0x20] sm:$0xff]
    %v2088 = vld [vmem:[%s16 + $0x28] sm:$0xff]
    %v2089 = vld [vmem:[%s16 + $0x30] sm:$0xff]
    %v2090 = vld [vmem:[%s16 + $0x38] sm:$0xff]
    %v2091 = vld [vmem:[%s16 + $0x40] sm:$0xff]
    %v2092 = vld [vmem:[%s16 + $0x48] sm:$0xff]
    %v2093 = vld [vmem:[%s16 + $0x50] sm:$0xff]
    %v2094 = vld [vmem:[%s16 + $0x58] sm:$0xff]
    %v2095 = vld [vmem:[%s16 + $0x60] sm:$0xff]
    %v2096 = vld [vmem:[%s16 + $0x68] sm:$0xff]
    %v2097 = vld [vmem:[%s16 + $0x70] sm:$0xff]
    %v2098 = vld [vmem:[%s16 + $0x78] sm:$0xff]
    %v2099 = vld [vmem:[%s17] sm:$0x1]
    %v2101 = vlaneseq
    %v2102 = vshrl.u32 %v2101, 7
    %v2103 = vsub.s32 0, %v2102
    %v2104 = vrot.slane %v2099, %v2103
    %2106 = vmatprep.subr.mxu0 0.0
    %2107 = vmatpush1.msra.mxu0 %v2083
    %2108 = vmatprep.subr.mxu0 0.0
    %2109 = vmatpush1.msra.mxu0 %v2084
    %2110 = vmatprep.subr.mxu0 0.0
    %2111 = vmatpush1.msra.mxu0 %v2085
    %2112 = vmatprep.subr.mxu0 0.0
    %2113 = vmatpush1.msra.mxu0 %v2086
    %2114 = vmatprep.subr.mxu0 0.0
    %2115 = vmatpush1.msra.mxu0 %v2087
    %2116 = vmatprep.subr.mxu0 0.0
    %2117 = vmatpush1.msra.mxu0 %v2088
    %2118 = vmatprep.subr.mxu0 0.0
    %2119 = vmatpush1.msra.mxu0 %v2089
    %2120 = vmatprep.subr.mxu0 0.0
    %2121 = vmatpush1.msra.mxu0 %v2090
    %2122 = vmatprep.subr.mxu0 0.0
    %2123 = vmatpush1.msra.mxu0 %v2091
    %2124 = vmatprep.subr.mxu0 0.0
    %2125 = vmatpush1.msra.mxu0 %v2092
    %2126 = vmatprep.subr.mxu0 0.0
    %2127 = vmatpush1.msra.mxu0 %v2093
    %2128 = vmatprep.subr.mxu0 0.0
    %2129 = vmatpush1.msra.mxu0 %v2094
    %2130 = vmatprep.subr.mxu0 0.0
    %2131 = vmatpush1.msra.mxu0 %v2095
    %2132 = vmatprep.subr.mxu0 0.0
    %2133 = vmatpush1.msra.mxu0 %v2096
    %2134 = vmatprep.subr.mxu0 0.0
    %2135 = vmatpush1.msra.mxu0 %v2097
    %2136 = vmatprep.subr.mxu0 0.0
    %2137 = vmatpush1.msra.mxu0 %v2098
    %2138 = vmatprep.subr.mxu0 0.0
    %2139 = vmatpush1.msra.mxu0 0.0
    %2140 = vmatprep.subr.mxu0 0.0
    %2141 = vmatpush1.msra.mxu0 0.0
    %2142 = vmatprep.subr.mxu0 0.0
    %2143 = vmatpush1.msra.mxu0 0.0
    %2144 = vmatprep.subr.mxu0 0.0
    %2145 = vmatpush1.msra.mxu0 0.0
    %2146 = vmatprep.subr.mxu0 0.0
    %2147 = vmatpush1.msra.mxu0 0.0
    %2148 = vmatprep.subr.mxu0 0.0
    %2149 = vmatpush1.msra.mxu0 0.0
    %2150 = vmatprep.subr.mxu0 0.0
    %2151 = vmatpush1.msra.mxu0 0.0
    %2152 = vmatprep.subr.mxu0 0.0
    %2153 = vmatpush1.msra.mxu0 0.0
    %2154 = vmatprep.subr.mxu0 0.0
    %2155 = vmatpush1.msra.mxu0 0.0
    %2156 = vmatprep.subr.mxu0 0.0
    %2157 = vmatpush1.msra.mxu0 0.0
    %2158 = vmatprep.subr.mxu0 0.0
    %2159 = vmatpush1.msra.mxu0 0.0
    %2160 = vmatprep.subr.mxu0 0.0
    %2161 = vmatpush1.msra.mxu0 0.0
    %2162 = vmatprep.subr.mxu0 0.0
    %2163 = vmatpush1.msra.mxu0 0.0
    %2164 = vmatprep.subr.mxu0 0.0
    %2165 = vmatpush1.msra.mxu0 0.0
    %2166 = vmatprep.subr.mxu0 0.0
    %2167 = vmatpush1.msra.mxu0 0.0
    %2168 = vmatprep.subr.mxu0 0.0
    %2169 = vmatpush1.msra.mxu0 0.0
    %2170 = vmatprep.mubr.f32.mxu0 0.0
    %2171 = vmatmul.mubr.f32.gmra.mrb[0].mxu0 %v2082
    %v2172 = vpop.f32.mrb[0].mxu0
    %v2173 = vadd.f32 %v2104, %v2172
    %v2174 = vpop.f32.mrb[0].mxu0
    %2175 = vdwg.mxu0
    %2176 = vst [vmem:[#allocation6] sm:$0x3] %v2173
    // Predicated region
    $region78: #{gin_forward.1} parent=1 // pred_check
      _
    $region79: #{gin_forward.1} parent=1 // pred_check_branch
      %2178 = sbr.rel (0) target = $region81
    $region80: #{gin_forward.1} parent=1 // pred_region
      %s2180 = ssub.s32 32, 32
      %2181 = vsyncadd [#allocation5], %s2180
      %s2183 = sshll.u32 [#allocation6], 4
      %s2184 = int_to_ptr.vmem [resolvable:$true] %s2183
      %2186 = dma.vmem_to_hbm [thread:$0]  %s2184, 32, %s18, [#allocation5]
    $region81: #{gin_forward.1} parent=1 // pred_fallthru
      _
    // Predicated region
    $region82: #{gin_forward.1} parent=1 // pred_check
      _
    $region83: #{gin_forward.1} parent=1 // pred_check_branch
      %2188 = sbr.rel (0) target = $region85
    $region84: #{gin_forward.1} parent=1 // pred_region
      %2189 = dma.done [#allocation5], 32
    $region85: #{gin_forward.1} parent=1 // pred_fallthru
      _
    %2190 = vsyncpa [#allocation4], 1
    %2191 = vsyncpa [#allocation5], 1

</llo_original>
